<compile_context>
chip_gen: v7x
topology: tpu7x:2x2x1
jax: 0.10.0
libtpu: 0.0.40
codegen_flags: <defaults>
</compile_context>

<pallas_src>
import jax
import jax.numpy as jnp
from jax import lax
from jax.experimental import pallas as pl
from jax.experimental.pallas import tpu as pltpu


HALO = 3          # kernel_size=7, padding=3
KTAPS = 7


def basic_block_kernel(x_ref, w1_ref, s1_ref, b1_ref, w2_ref, s2_ref, b2_ref,
                       fc1_ref, fc2_ref, o_ref):
    # x_ref block: (bt, L+6, C) f32, channels-last, per-sample zero halo of 3
    # rows on each end of L (so taps never leak across sample boundaries).
    bt, Lh, C = x_ref.shape
    L = Lh - 2 * HALO
    m = bt * L
    cout = o_ref.shape[-1]                      # lane-dense output channels (128)

    x = x_ref[...]                              # (bt, L+6, C) f32
    x_center = x[:, HALO:HALO + L, :]           # residual path (f32)

    def im2col(a3):
        # a3: (bt, L+6, C) f32.  Each tap is a static L-window slice of the
        # halo-padded slab; cast to bf16 per tap so the lane-concat and the
        # MXU feed run at half width.  Result: (m, 7*C) bf16.
        cols = [a3[:, k:k + L, :].astype(jnp.bfloat16) for k in range(KTAPS)]
        return jnp.concatenate(cols, axis=-1).reshape(m, KTAPS * C)

    # conv1 (single im2col matmul, K = 7*C, f32 accumulate) + BN1 + ReLU
    h = jnp.dot(im2col(x), w1_ref[...], preferred_element_type=jnp.float32)
    h = jnp.maximum(h * s1_ref[...] + b1_ref[...], 0.0)
    # dropout(p=0.2): identity in eval mode

    # conv2: slice back to the C real channels, re-halo along L in-kernel.
    h3 = h.reshape(bt, L, cout)
    zrows = jnp.zeros((bt, HALO, C), jnp.float32)
    h_halo = jnp.concatenate([zrows, h3[:, :, :C], zrows], axis=1)   # (bt, L+6, C)
    h = jnp.dot(im2col(h_halo), w2_ref[...], preferred_element_type=jnp.float32)
    h = h * s2_ref[...] + b2_ref[...]                                # BN2 (folded)
    h3 = h.reshape(bt, L, cout)

    # SE: squeeze (mean over L per sample), two tiny FCs (hidden padded to 8),
    # sigmoid via EUP reciprocal, channel-wise scale.
    y = jnp.mean(h3, axis=1)                                          # (bt, cout)
    y = jnp.maximum(jnp.dot(y, fc1_ref[...], preferred_element_type=jnp.float32), 0.0)
    y = jnp.dot(y, fc2_ref[...], preferred_element_type=jnp.float32)
    gate = pl.reciprocal(1.0 + jnp.exp(-y), approx=True)              # sigmoid
    h3 = h3 * gate[:, None, :]

    # Residual + ReLU.  Padded lanes of h3 are exactly zero, so the padded
    # part of the lane-dense output stays zero.
    x_res = jnp.concatenate(
        [x_center, jnp.zeros((bt, L, cout - C), jnp.float32)], axis=-1)
    o_ref[...] = jnp.maximum(h3 + x_res, 0.0).astype(o_ref.dtype)


def _pick_bt(B, L, max_rows=2048):
    """Batch-tile size: prefer >= 2 'parallel' grid steps (megacore / v7x two
    TensorCores), then the largest per-step tile under a conservative VMEM
    row budget (each folded row carries a few KB of live intermediates)."""
    divs = [d for d in range(1, B + 1) if B % d == 0 and d * L <= max_rows]
    if not divs:
        return 1
    multi = [d for d in divs if B // d >= 2]
    return max(multi) if multi else max(divs)


def basic_block_pallas(x_ncl, w1_p, s1_p, b1_p, w2_p, s2_p, b2_p, fc1_p, fc2_p):
    """x_ncl: (B, C, L) f32.
    w*_p: (7*C, Cp) bf16 im2col conv weights (Cout padded to Cp=128).
    s*/b*_p: (1, Cp) f32 folded BN scale/bias.
    fc1_p: (Cp, Crp) f32, fc2_p: (Crp, Cp) f32 (Crp small, e.g. 8).
    Returns (B, C, L) f32."""
    B, C, L = x_ncl.shape
    K = w1_p.shape[0]            # 7*C
    Cp = w1_p.shape[1]           # 128
    Crp = fc1_p.shape[1]

    bt = _pick_bt(B, L)

    # Layout plumbing (once, wrapper-side): NCL -> NLC with a 3-row zero halo
    # per sample along L.  Channels stay compact (C) on the contraction side.
    x_nlc = jnp.transpose(x_ncl, (0, 2, 1))                    # (B, L, C)
    x_halo = jnp.pad(x_nlc, ((0, 0), (HALO, HALO), (0, 0)))    # (B, L+6, C)

    out_pad = pl.pallas_call(
        basic_block_kernel,
        out_shape=jax.ShapeDtypeStruct((B, L, Cp), jnp.float32),
        grid_spec=pltpu.PrefetchScalarGridSpec(
            num_scalar_prefetch=0,
            grid=(B // bt,),
            in_specs=[
                pl.BlockSpec((bt, L + 2 * HALO, C), lambda i: (i, 0, 0)),  # x (halo)
                pl.BlockSpec((K, Cp),  lambda i: (0, 0)),                  # w1 im2col bf16
                pl.BlockSpec((1, Cp),  lambda i: (0, 0)),                  # bn1 scale
                pl.BlockSpec((1, Cp),  lambda i: (0, 0)),                  # bn1 bias
                pl.BlockSpec((K, Cp),  lambda i: (0, 0)),                  # w2 im2col bf16
                pl.BlockSpec((1, Cp),  lambda i: (0, 0)),                  # bn2 scale
                pl.BlockSpec((1, Cp),  lambda i: (0, 0)),                  # bn2 bias
                pl.BlockSpec((Cp, Crp), lambda i: (0, 0)),                 # SE fc1 (T)
                pl.BlockSpec((Crp, Cp), lambda i: (0, 0)),                 # SE fc2 (T)
            ],
            out_specs=pl.BlockSpec((bt, L, Cp), lambda i: (i, 0, 0)),
        ),
        compiler_params=pltpu.CompilerParams(
            dimension_semantics=("parallel",)),
    )(x_halo, w1_p, s1_p, b1_p, w2_p, s2_p, b2_p, fc1_p, fc2_p)

    return jnp.transpose(out_pad[:, :, :C], (0, 2, 1))         # back to NCL


def reference_forward(x, w1_oik, g1, be1, m1, v1, w2_oik, g2, be2, m2, v2,
                      fc1_w, fc2_w, eps=1e-5):
    """Pure-JAX f32 reference matching the PyTorch forward (eval mode)."""
    def conv(inp, w):
        return lax.conv_general_dilated(inp, w, window_strides=(1,),
                                        padding=((3, 3),),
                                        dimension_numbers=('NCH', 'OIH', 'NCH'))

    def bn(inp, g, be, m, v):
        return (inp - m[None, :, None]) * (g / jnp.sqrt(v + eps))[None, :, None] \
               + be[None, :, None]

    out = jax.nn.relu(bn(conv(x, w1_oik), g1, be1, m1, v1))
    out = bn(conv(out, w2_oik), g2, be2, m2, v2)
    y = jnp.mean(out, axis=2)                                  # (B, C)
    y = jax.nn.relu(y @ fc1_w.T)
    y = jax.nn.sigmoid(y @ fc2_w.T)
    out = out * y[:, :, None]
    return jax.nn.relu(out + x)


if __name__ == "__main__":
    B, C, L = 2, 32, 64        # inplanes == planes == 32 (reduction=16 -> hidden=2)
    red = 16
    Cr = C // red
    Cp = 128                   # lane-dense Cout padding
    Crp = 8                    # SE hidden padding (2 -> 8), was 128
    eps = 1e-5

    key = jax.random.PRNGKey(0)
    ks = jax.random.split(key, 12)

    x = jax.random.normal(ks[0], (B, C, L), jnp.float32)

    # Conv weights, PyTorch layout (Cout, Cin, K), bias=False
    w1_oik = jax.random.normal(ks[1], (C, C, 7), jnp.float32) * 0.1
    w2_oik = jax.random.normal(ks[2], (C, C, 7), jnp.float32) * 0.1

    # BatchNorm params / running stats (eval mode)
    g1 = 1.0 + 0.1 * jax.random.normal(ks[3], (C,), jnp.float32)
    be1 = 0.1 * jax.random.normal(ks[4], (C,), jnp.float32)
    m1 = 0.05 * jax.random.normal(ks[5], (C,), jnp.float32)
    v1 = 0.5 + jnp.abs(jax.random.normal(ks[6], (C,), jnp.float32)) * 0.5

    g2 = 1.0 + 0.1 * jax.random.normal(ks[7], (C,), jnp.float32)
    be2 = 0.1 * jax.random.normal(ks[8], (C,), jnp.float32)
    m2 = 0.05 * jax.random.normal(ks[9], (C,), jnp.float32)
    v2 = 0.5 + jnp.abs(jax.random.normal(ks[10], (C,), jnp.float32)) * 0.5

    # SE fc weights, PyTorch Linear layout (out_features, in_features), bias=False
    fkeys = jax.random.split(ks[11], 2)
    fc1_w = jax.random.normal(fkeys[0], (Cr, C), jnp.float32) * 0.2
    fc2_w = jax.random.normal(fkeys[1], (C, Cr), jnp.float32) * 0.2

    # --- parameter plumbing (wrapper-side glue) ---
    # Fold BN into scale/bias, pad Cout to Cp, reshape to (1, Cp).
    s1v = g1 / jnp.sqrt(v1 + eps)
    s2v = g2 / jnp.sqrt(v2 + eps)
    s1_p = jnp.pad(s1v, (0, Cp - C)).reshape(1, Cp)
    b1_p = jnp.pad(be1 - m1 * s1v, (0, Cp - C)).reshape(1, Cp)
    s2_p = jnp.pad(s2v, (0, Cp - C)).reshape(1, Cp)
    b2_p = jnp.pad(be2 - m2 * s2v, (0, Cp - C)).reshape(1, Cp)

    # Conv weights: (Cout, Cin, 7) -> (7, Cin, Cout) -> pad Cout only ->
    # compact im2col layout (7*Cin, Cp) -> bf16 for the MXU.
    def prep_conv_w(w_oik):
        w_kic = jnp.transpose(w_oik, (2, 1, 0))                   # (7, Cin, Cout)
        w_kic = jnp.pad(w_kic, ((0, 0), (0, 0), (0, Cp - C)))     # (7, Cin, Cp)
        return w_kic.reshape(7 * C, Cp).astype(jnp.bfloat16)      # (224, 128) bf16

    w1_p = prep_conv_w(w1_oik)
    w2_p = prep_conv_w(w2_oik)

    # SE fc weights transposed for right-multiplication, minimally padded (f32).
    fc1_p = jnp.pad(fc1_w.T, ((0, Cp - C), (0, Crp - Cr)))        # (128, 8)
    fc2_p = jnp.pad(fc2_w.T, ((0, Crp - Cr), (0, Cp - C)))        # (8, 128)

    out = basic_block_pallas(x, w1_p, s1_p, b1_p, w2_p, s2_p, b2_p, fc1_p, fc2_p)
    out = jax.block_until_ready(out)

    ref = reference_forward(x, w1_oik, g1, be1, m1, v1, w2_oik, g2, be2, m2, v2,
                            fc1_w, fc2_w, eps)
    ref = jax.block_until_ready(ref)

    assert out.shape == (B, C, L)
    # Tolerance accounts for bf16 MXU inputs (f32 accumulation) + approx sigmoid.
    assert jnp.allclose(out, ref, rtol=5e-2, atol=5e-2), \
        f"max abs diff = {jnp.max(jnp.abs(out - ref))}"

    print("KERNEL_OK")
</pallas_src>

<mosaic_0001>
module attributes {stable_mosaic.version = 11 : i64} {
  func.func @basic_block_kernel(%arg0: i32, %arg1: memref<1x70x32xf32, #tpu.memory_space<vmem>>, %arg2: memref<224x128xbf16, #tpu.memory_space<vmem>>, %arg3: memref<1x128xf32, #tpu.memory_space<vmem>>, %arg4: memref<1x128xf32, #tpu.memory_space<vmem>>, %arg5: memref<224x128xbf16, #tpu.memory_space<vmem>>, %arg6: memref<1x128xf32, #tpu.memory_space<vmem>>, %arg7: memref<1x128xf32, #tpu.memory_space<vmem>>, %arg8: memref<128x8xf32, #tpu.memory_space<vmem>>, %arg9: memref<8x128xf32, #tpu.memory_space<vmem>>, %arg10: memref<1x64x128xf32, #tpu.memory_space<vmem>>) attributes {dimension_semantics = [#tpu.dimension_semantics<parallel>], iteration_bounds = array<i64: 2>, scalar_prefetch = 0 : i64, scratch_operands = 0 : i64, tpu.core_type = #tpu.core_type<tc>, window_params = [{transform_indices = @transform_0, window_bounds = array<i64: 1, 70, 32>}, {pipeline_mode = #tpu.pipeline_mode<synchronous>, transform_indices = @transform_1, window_bounds = array<i64: 224, 128>}, {pipeline_mode = #tpu.pipeline_mode<synchronous>, transform_indices = @transform_2, window_bounds = array<i64: 1, 128>}, {pipeline_mode = #tpu.pipeline_mode<synchronous>, transform_indices = @transform_3, window_bounds = array<i64: 1, 128>}, {pipeline_mode = #tpu.pipeline_mode<synchronous>, transform_indices = @transform_4, window_bounds = array<i64: 224, 128>}, {pipeline_mode = #tpu.pipeline_mode<synchronous>, transform_indices = @transform_5, window_bounds = array<i64: 1, 128>}, {pipeline_mode = #tpu.pipeline_mode<synchronous>, transform_indices = @transform_6, window_bounds = array<i64: 1, 128>}, {pipeline_mode = #tpu.pipeline_mode<synchronous>, transform_indices = @transform_7, window_bounds = array<i64: 128, 8>}, {pipeline_mode = #tpu.pipeline_mode<synchronous>, transform_indices = @transform_8, window_bounds = array<i64: 8, 128>}, {transform_indices = @transform_9, window_bounds = array<i64: 1, 64, 128>}]} {
    %c0 = arith.constant 0 : index
    %c0_0 = arith.constant 0 : index
    %c0_1 = arith.constant 0 : index
    %0 = vector.load %arg1[%c0, %c0_0, %c0_1] : memref<1x70x32xf32, #tpu.memory_space<vmem>>, vector<1x70x32xf32>
    %1 = vector.extract_strided_slice %0 {offsets = [0, 3, 0], sizes = [1, 64, 32], strides = [1, 1, 1]} : vector<1x70x32xf32> to vector<1x64x32xf32>
    %2 = vector.extract_strided_slice %0 {offsets = [0, 0, 0], sizes = [1, 64, 32], strides = [1, 1, 1]} : vector<1x70x32xf32> to vector<1x64x32xf32>
    %3 = arith.truncf %2 : vector<1x64x32xf32> to vector<1x64x32xbf16>
    %4 = vector.extract_strided_slice %0 {offsets = [0, 1, 0], sizes = [1, 64, 32], strides = [1, 1, 1]} : vector<1x70x32xf32> to vector<1x64x32xf32>
    %5 = arith.truncf %4 : vector<1x64x32xf32> to vector<1x64x32xbf16>
    %6 = vector.extract_strided_slice %0 {offsets = [0, 2, 0], sizes = [1, 64, 32], strides = [1, 1, 1]} : vector<1x70x32xf32> to vector<1x64x32xf32>
    %7 = arith.truncf %6 : vector<1x64x32xf32> to vector<1x64x32xbf16>
    %8 = vector.extract_strided_slice %0 {offsets = [0, 3, 0], sizes = [1, 64, 32], strides = [1, 1, 1]} : vector<1x70x32xf32> to vector<1x64x32xf32>
    %9 = arith.truncf %8 : vector<1x64x32xf32> to vector<1x64x32xbf16>
    %10 = vector.extract_strided_slice %0 {offsets = [0, 4, 0], sizes = [1, 64, 32], strides = [1, 1, 1]} : vector<1x70x32xf32> to vector<1x64x32xf32>
    %11 = arith.truncf %10 : vector<1x64x32xf32> to vector<1x64x32xbf16>
    %12 = vector.extract_strided_slice %0 {offsets = [0, 5, 0], sizes = [1, 64, 32], strides = [1, 1, 1]} : vector<1x70x32xf32> to vector<1x64x32xf32>
    %13 = arith.truncf %12 : vector<1x64x32xf32> to vector<1x64x32xbf16>
    %14 = vector.extract_strided_slice %0 {offsets = [0, 6, 0], sizes = [1, 64, 32], strides = [1, 1, 1]} : vector<1x70x32xf32> to vector<1x64x32xf32>
    %15 = arith.truncf %14 : vector<1x64x32xf32> to vector<1x64x32xbf16>
    %16 = tpu.concatenate %3, %5, %7, %9, %11, %13, %15 in 2 : vector<1x64x32xbf16>, vector<1x64x32xbf16>, vector<1x64x32xbf16>, vector<1x64x32xbf16>, vector<1x64x32xbf16>, vector<1x64x32xbf16>, vector<1x64x32xbf16> -> vector<1x64x224xbf16>
    %17 = vector.shape_cast %16 : vector<1x64x224xbf16> to vector<64x224xbf16>
    %c0_2 = arith.constant 0 : index
    %c0_3 = arith.constant 0 : index
    %18 = vector.load %arg2[%c0_2, %c0_3] : memref<224x128xbf16, #tpu.memory_space<vmem>>, vector<224x128xbf16>
    %cst = arith.constant dense<0.000000e+00> : vector<64x128xf32>
    %19 = tpu.matmul %17, %18, %cst {dimension_numbers = #tpu.dot_dimension_numbers<[1], [0], [0], [1], [0, 0, 1, 1], [], []>} : vector<64x224xbf16>, vector<224x128xbf16>, vector<64x128xf32> -> vector<64x128xf32>
    %c0_4 = arith.constant 0 : index
    %c0_5 = arith.constant 0 : index
    %20 = vector.load %arg3[%c0_4, %c0_5] : memref<1x128xf32, #tpu.memory_space<vmem>>, vector<1x128xf32>
    %21 = vector.broadcast %20 : vector<1x128xf32> to vector<64x128xf32>
    %22 = arith.mulf %19, %21 : vector<64x128xf32>
    %c0_6 = arith.constant 0 : index
    %c0_7 = arith.constant 0 : index
    %23 = vector.load %arg4[%c0_6, %c0_7] : memref<1x128xf32, #tpu.memory_space<vmem>>, vector<1x128xf32>
    %24 = vector.broadcast %23 : vector<1x128xf32> to vector<64x128xf32>
    %25 = arith.addf %22, %24 : vector<64x128xf32>
    %cst_8 = arith.constant 0.000000e+00 : f32
    %26 = vector.broadcast %cst_8 : f32 to vector<64x128xf32>
    %27 = arith.maximumf %25, %26 : vector<64x128xf32>
    %28 = vector.shape_cast %27 : vector<64x128xf32> to vector<1x64x128xf32>
    %cst_9 = arith.constant 0.000000e+00 : f32
    %29 = vector.broadcast %cst_9 : f32 to vector<1x3x32xf32>
    %30 = vector.extract_strided_slice %28 {offsets = [0, 0, 0], sizes = [1, 64, 32], strides = [1, 1, 1]} : vector<1x64x128xf32> to vector<1x64x32xf32>
    %31 = tpu.concatenate %29, %30, %29 in 1 : vector<1x3x32xf32>, vector<1x64x32xf32>, vector<1x3x32xf32> -> vector<1x70x32xf32>
    %32 = vector.extract_strided_slice %31 {offsets = [0, 0, 0], sizes = [1, 64, 32], strides = [1, 1, 1]} : vector<1x70x32xf32> to vector<1x64x32xf32>
    %33 = arith.truncf %32 : vector<1x64x32xf32> to vector<1x64x32xbf16>
    %34 = vector.extract_strided_slice %31 {offsets = [0, 1, 0], sizes = [1, 64, 32], strides = [1, 1, 1]} : vector<1x70x32xf32> to vector<1x64x32xf32>
    %35 = arith.truncf %34 : vector<1x64x32xf32> to vector<1x64x32xbf16>
    %36 = vector.extract_strided_slice %31 {offsets = [0, 2, 0], sizes = [1, 64, 32], strides = [1, 1, 1]} : vector<1x70x32xf32> to vector<1x64x32xf32>
    %37 = arith.truncf %36 : vector<1x64x32xf32> to vector<1x64x32xbf16>
    %38 = vector.extract_strided_slice %31 {offsets = [0, 3, 0], sizes = [1, 64, 32], strides = [1, 1, 1]} : vector<1x70x32xf32> to vector<1x64x32xf32>
    %39 = arith.truncf %38 : vector<1x64x32xf32> to vector<1x64x32xbf16>
    %40 = vector.extract_strided_slice %31 {offsets = [0, 4, 0], sizes = [1, 64, 32], strides = [1, 1, 1]} : vector<1x70x32xf32> to vector<1x64x32xf32>
    %41 = arith.truncf %40 : vector<1x64x32xf32> to vector<1x64x32xbf16>
    %42 = vector.extract_strided_slice %31 {offsets = [0, 5, 0], sizes = [1, 64, 32], strides = [1, 1, 1]} : vector<1x70x32xf32> to vector<1x64x32xf32>
    %43 = arith.truncf %42 : vector<1x64x32xf32> to vector<1x64x32xbf16>
    %44 = vector.extract_strided_slice %31 {offsets = [0, 6, 0], sizes = [1, 64, 32], strides = [1, 1, 1]} : vector<1x70x32xf32> to vector<1x64x32xf32>
    %45 = arith.truncf %44 : vector<1x64x32xf32> to vector<1x64x32xbf16>
    %46 = tpu.concatenate %33, %35, %37, %39, %41, %43, %45 in 2 : vector<1x64x32xbf16>, vector<1x64x32xbf16>, vector<1x64x32xbf16>, vector<1x64x32xbf16>, vector<1x64x32xbf16>, vector<1x64x32xbf16>, vector<1x64x32xbf16> -> vector<1x64x224xbf16>
    %47 = vector.shape_cast %46 : vector<1x64x224xbf16> to vector<64x224xbf16>
    %c0_10 = arith.constant 0 : index
    %c0_11 = arith.constant 0 : index
    %48 = vector.load %arg5[%c0_10, %c0_11] : memref<224x128xbf16, #tpu.memory_space<vmem>>, vector<224x128xbf16>
    %cst_12 = arith.constant dense<0.000000e+00> : vector<64x128xf32>
    %49 = tpu.matmul %47, %48, %cst_12 {dimension_numbers = #tpu.dot_dimension_numbers<[1], [0], [0], [1], [0, 0, 1, 1], [], []>} : vector<64x224xbf16>, vector<224x128xbf16>, vector<64x128xf32> -> vector<64x128xf32>
    %c0_13 = arith.constant 0 : index
    %c0_14 = arith.constant 0 : index
    %50 = vector.load %arg6[%c0_13, %c0_14] : memref<1x128xf32, #tpu.memory_space<vmem>>, vector<1x128xf32>
    %51 = vector.broadcast %50 : vector<1x128xf32> to vector<64x128xf32>
    %52 = arith.mulf %49, %51 : vector<64x128xf32>
    %c0_15 = arith.constant 0 : index
    %c0_16 = arith.constant 0 : index
    %53 = vector.load %arg7[%c0_15, %c0_16] : memref<1x128xf32, #tpu.memory_space<vmem>>, vector<1x128xf32>
    %54 = vector.broadcast %53 : vector<1x128xf32> to vector<64x128xf32>
    %55 = arith.addf %52, %54 : vector<64x128xf32>
    %56 = vector.shape_cast %55 : vector<64x128xf32> to vector<1x64x128xf32>
    %cst_17 = arith.constant dense<0.000000e+00> : vector<1x128xf32>
    %57 = vector.multi_reduction <add>, %56, %cst_17 [1] : vector<1x64x128xf32> to vector<1x128xf32>
    %cst_18 = arith.constant 6.400000e+01 : f32
    %58 = vector.broadcast %cst_18 : f32 to vector<1x128xf32>
    %59 = arith.divf %57, %58 : vector<1x128xf32>
    %c0_19 = arith.constant 0 : index
    %c0_20 = arith.constant 0 : index
    %60 = vector.load %arg8[%c0_19, %c0_20] : memref<128x8xf32, #tpu.memory_space<vmem>>, vector<128x8xf32>
    %cst_21 = arith.constant dense<0.000000e+00> : vector<1x8xf32>
    %61 = tpu.matmul %59, %60, %cst_21 {dimension_numbers = #tpu.dot_dimension_numbers<[1], [0], [0], [1], [0, 0, 1, 1], [], []>} : vector<1x128xf32>, vector<128x8xf32>, vector<1x8xf32> -> vector<1x8xf32>
    %cst_22 = arith.constant 0.000000e+00 : f32
    %62 = vector.broadcast %cst_22 : f32 to vector<1x8xf32>
    %63 = arith.maximumf %61, %62 : vector<1x8xf32>
    %c0_23 = arith.constant 0 : index
    %c0_24 = arith.constant 0 : index
    %64 = vector.load %arg9[%c0_23, %c0_24] : memref<8x128xf32, #tpu.memory_space<vmem>>, vector<8x128xf32>
    %cst_25 = arith.constant dense<0.000000e+00> : vector<1x128xf32>
    %65 = tpu.matmul %63, %64, %cst_25 {dimension_numbers = #tpu.dot_dimension_numbers<[1], [0], [0], [1], [0, 0, 1, 1], [], []>} : vector<1x8xf32>, vector<8x128xf32>, vector<1x128xf32> -> vector<1x128xf32>
    %cst_26 = arith.constant 0.000000e+00 : f32
    %66 = vector.broadcast %cst_26 : f32 to vector<1x128xf32>
    %67 = arith.subf %66, %65 : vector<1x128xf32>
    %68 = math.exp %67 : vector<1x128xf32>
    %cst_27 = arith.constant 1.000000e+00 : f32
    %69 = vector.broadcast %cst_27 : f32 to vector<1x128xf32>
    %70 = arith.addf %69, %68 : vector<1x128xf32>
    %71 = tpu.reciprocal %70 {approx = true} : vector<1x128xf32> -> vector<1x128xf32>
    %72 = vector.shape_cast %71 : vector<1x128xf32> to vector<1x1x128xf32>
    %73 = vector.broadcast %72 : vector<1x1x128xf32> to vector<1x64x128xf32>
    %74 = arith.mulf %56, %73 : vector<1x64x128xf32>
    %cst_28 = arith.constant 0.000000e+00 : f32
    %75 = vector.broadcast %cst_28 : f32 to vector<1x64x96xf32>
    %76 = tpu.concatenate %1, %75 in 2 : vector<1x64x32xf32>, vector<1x64x96xf32> -> vector<1x64x128xf32>
    %77 = arith.addf %74, %76 : vector<1x64x128xf32>
    %cst_29 = arith.constant 0.000000e+00 : f32
    %78 = vector.broadcast %cst_29 : f32 to vector<1x64x128xf32>
    %79 = arith.maximumf %77, %78 : vector<1x64x128xf32>
    %c0_30 = arith.constant 0 : index
    %c0_31 = arith.constant 0 : index
    %c0_32 = arith.constant 0 : index
    %80 = vector.load %arg10[%c0_30, %c0_31, %c0_32] : memref<1x64x128xf32, #tpu.memory_space<vmem>>, vector<1x64x128xf32>
    tpu.vector_store %arg10[%c0_30, %c0_31, %c0_32], %79 {strides = array<i32>} : memref<1x64x128xf32, #tpu.memory_space<vmem>>, vector<1x64x128xf32>,
    return
  }
  func.func @transform_0(%arg0: i32) -> (i32, i32, i32) {
    %c0_i32 = arith.constant 0 : i32
    %c0_i32_0 = arith.constant 0 : i32
    %c0_i32_1 = arith.constant 0 : i32
    return %arg0, %c0_i32, %c0_i32_0 : i32, i32, i32
  }
  func.func @transform_1(%arg0: i32) -> (i32, i32) {
    %c0_i32 = arith.constant 0 : i32
    %c0_i32_0 = arith.constant 0 : i32
    %c0_i32_1 = arith.constant 0 : i32
    return %c0_i32, %c0_i32_0 : i32, i32
  }
  func.func @transform_2(%arg0: i32) -> (i32, i32) {
    %c0_i32 = arith.constant 0 : i32
    %c0_i32_0 = arith.constant 0 : i32
    %c0_i32_1 = arith.constant 0 : i32
    return %c0_i32, %c0_i32_0 : i32, i32
  }
  func.func @transform_3(%arg0: i32) -> (i32, i32) {
    %c0_i32 = arith.constant 0 : i32
    %c0_i32_0 = arith.constant 0 : i32
    %c0_i32_1 = arith.constant 0 : i32
    return %c0_i32, %c0_i32_0 : i32, i32
  }
  func.func @transform_4(%arg0: i32) -> (i32, i32) {
    %c0_i32 = arith.constant 0 : i32
    %c0_i32_0 = arith.constant 0 : i32
    %c0_i32_1 = arith.constant 0 : i32
    return %c0_i32, %c0_i32_0 : i32, i32
  }
  func.func @transform_5(%arg0: i32) -> (i32, i32) {
    %c0_i32 = arith.constant 0 : i32
    %c0_i32_0 = arith.constant 0 : i32
    %c0_i32_1 = arith.constant 0 : i32
    return %c0_i32, %c0_i32_0 : i32, i32
  }
  func.func @transform_6(%arg0: i32) -> (i32, i32) {
    %c0_i32 = arith.constant 0 : i32
    %c0_i32_0 = arith.constant 0 : i32
    %c0_i32_1 = arith.constant 0 : i32
    return %c0_i32, %c0_i32_0 : i32, i32
  }
  func.func @transform_7(%arg0: i32) -> (i32, i32) {
    %c0_i32 = arith.constant 0 : i32
    %c0_i32_0 = arith.constant 0 : i32
    %c0_i32_1 = arith.constant 0 : i32
    return %c0_i32, %c0_i32_0 : i32, i32
  }
  func.func @transform_8(%arg0: i32) -> (i32, i32) {
    %c0_i32 = arith.constant 0 : i32
    %c0_i32_0 = arith.constant 0 : i32
    %c0_i32_1 = arith.constant 0 : i32
    return %c0_i32, %c0_i32_0 : i32, i32
  }
  func.func @transform_9(%arg0: i32) -> (i32, i32, i32) {
    %c0_i32 = arith.constant 0 : i32
    %c0_i32_0 = arith.constant 0 : i32
    %c0_i32_1 = arith.constant 0 : i32
    return %arg0, %c0_i32, %c0_i32_0 : i32, i32, i32
  }
}

</mosaic_0001>

<llo_original>
// kernel: tpu_custom_call.1
$region0: #{tpu_custom_call.1}
  #allocation0 [shape = 'u32[]', space=smem, size = 0x4, offset = 0x4, fixed_abs, tag = 'smem constant byte address 0x4 - core index']
  #allocation1 [shape = 'u32[144,128]{1,0:T(1,128)}', space=vmem, size = 0x12000, scoped, tag = 'internal scratch']
  %s0 = inlined_call_operand.vmem [shape: f32[2,70,32], index: 0, kind: input, shape index: {}]
  %s1 = inlined_call_operand.vmem [shape: bf16[224,128], index: 1, kind: input, shape index: {}]
  %s2 = inlined_call_operand.vmem [shape: f32[1,128], index: 2, kind: input, shape index: {}]
  %s3 = inlined_call_operand.vmem [shape: f32[1,128], index: 3, kind: input, shape index: {}]
  %s4 = inlined_call_operand.vmem [shape: bf16[224,128], index: 4, kind: input, shape index: {}]
  %s5 = inlined_call_operand.vmem [shape: f32[1,128], index: 5, kind: input, shape index: {}]
  %s6 = inlined_call_operand.vmem [shape: f32[1,128], index: 6, kind: input, shape index: {}]
  %s7 = inlined_call_operand.vmem [shape: f32[128,8], index: 7, kind: input, shape index: {}]
  %s8 = inlined_call_operand.vmem [shape: f32[8,128], index: 8, kind: input, shape index: {}]
  %s9 = inlined_call_operand.hbm [shape: f32[2,64,128], index: 9, kind: output, shape index: {}]
  %s10 = sld [smem:[#allocation0]]
  $region69: #{tpu_custom_call.1} parent=0
    _
  %s12 = ssub.s32 1, %s10
  %s13 = scalar_select 0, %s12, %s10
  $region1: #{tpu_custom_call.1} parent=0
    #allocation2 [shape = 'u8[65536]{0}', space=vmem, size = 0x10000, scoped, tag = 'output window, operand 0']
    #allocation3 [shape = 's32[2]{0}', space=sflag, size = 0x8, scoped, tag = 'scoped memory for tpu_custom_call.1']
    %14 = vsyncpa [#allocation3], 0
    %s15 = scalar_lea.sflag [#allocation3], 1
    %16 = vsyncpa %s15, 0
    loop: start=0, step=1, limit=4
    $region2: #{tpu_custom_call.1} parent=1 // loop_pre_header
      _
    $region3: #{tpu_custom_call.1} parent=1 // loop_header
      %s18 = sphi 0, %s22
      %p19 = scmp.ge.s32.totalorder %s18, 4
      %s28 = sphi 0, %s30
      %s31 = sphi 0, %s28
      %s32 = sphi 0, %s31
      %s48 = sphi 0, %s32
      %s52 = sphi 0, %s52
      %s54 = sphi 0, %s52
      %s55 = sphi 0, %s54
      %s69 = sphi 0, %s55
      %s73 = sphi 0, %s73
      %s75 = sphi 0, %s73
      %s76 = sphi 0, %s75
      %s90 = sphi 0, %s76
      %s94 = sphi 0, %s94
      %s96 = sphi 0, %s94
      %s97 = sphi 0, %s96
      %s111 = sphi 0, %s97
      %s115 = sphi 0, %s115
      %s117 = sphi 0, %s115
      %s118 = sphi 0, %s117
      %s132 = sphi 0, %s118
      %s136 = sphi 0, %s136
      %s138 = sphi 0, %s136
      %s139 = sphi 0, %s138
      %s153 = sphi 0, %s139
      %s157 = sphi 0, %s157
      %s159 = sphi 0, %s157
      %s160 = sphi 0, %s159
      %s174 = sphi 0, %s160
      %s178 = sphi 0, %s178
      %s180 = sphi 0, %s178
      %s181 = sphi 0, %s180
      %s195 = sphi 0, %s181
      %s199 = sphi 0, %s199
      %s201 = sphi 0, %s199
      %s202 = sphi 0, %s201
      %s216 = sphi 0, %s202
      %s222 = sphi 0, %s224
      %s225 = sphi 0, %s222
      %s226 = sphi 0, %s225
      %s242 = sphi 0, %s226
    $region4: #{tpu_custom_call.1} parent=1 // loop_header_branch
      %21 = sbr.rel (%p19) target = $region8
    $region5: #{tpu_custom_call.1} parent=1 // loop_body
      %s23 = ssub.s32 %s18, 1
      %s24 = ssub.s32 %s18, 2
      %s25 = sadd.s32 %s18, 1
      %s26 = ssub.s32 %s18, %s25
      %p27 = scmp.eq.s32.totalorder %s26, 0
      %s29 = sadd.s32 %s28, 1
      %s30 = scalar_select %p27, %s28, %s29
      %p33 = pneg %p27
      %p34 = scmp.eq.s32.totalorder %s18, 1
      %p35 = por %p33, %p34
      %p36 = scmp.ne.s32.totalorder %s28, %s31
      %p37 = scmp.eq.s32.totalorder %s18, 0
      %p38 = por %p36, %p37
      %p39 = scmp.ne.s32.totalorder %s28, %s31
      %p40 = scmp.eq.s32.totalorder %s23, 1
      %p41 = por %p39, %p40
      %p42 = scmp.ne.s32.totalorder %s31, %s32
      %p43 = scmp.eq.s32.totalorder %s23, 0
      %p44 = por %p42, %p43
      %p45 = scmp.ne.s32.totalorder %s31, %s32
      %p46 = scmp.eq.s32.totalorder %s24, 1
      %p47 = por %p45, %p46
      %p49 = scmp.ne.s32.totalorder %s32, %s48
      %p50 = scmp.eq.s32.totalorder %s24, 0
      %p51 = por %p49, %p50
      %s53 = sadd.s32 %s52, 1
      %p56 = scmp.eq.s32.totalorder %s18, 1
      %p57 = scmp.ne.s32.totalorder %s52, %s54
      %p58 = scmp.eq.s32.totalorder %s18, 0
      %p59 = por %p57, %p58
      %p60 = scmp.ne.s32.totalorder %s52, %s54
      %p61 = scmp.eq.s32.totalorder %s23, 1
      %p62 = por %p60, %p61
      %p63 = scmp.ne.s32.totalorder %s54, %s55
      %p64 = scmp.eq.s32.totalorder %s23, 0
      %p65 = por %p63, %p64
      %p66 = scmp.ne.s32.totalorder %s54, %s55
      %p67 = scmp.eq.s32.totalorder %s24, 1
      %p68 = por %p66, %p67
      %p70 = scmp.ne.s32.totalorder %s55, %s69
      %p71 = scmp.eq.s32.totalorder %s24, 0
      %p72 = por %p70, %p71
      %s74 = sadd.s32 %s73, 1
      %p77 = scmp.eq.s32.totalorder %s18, 1
      %p78 = scmp.ne.s32.totalorder %s73, %s75
      %p79 = scmp.eq.s32.totalorder %s18, 0
      %p80 = por %p78, %p79
      %p81 = scmp.ne.s32.totalorder %s73, %s75
      %p82 = scmp.eq.s32.totalorder %s23, 1
      %p83 = por %p81, %p82
      %p84 = scmp.ne.s32.totalorder %s75, %s76
      %p85 = scmp.eq.s32.totalorder %s23, 0
      %p86 = por %p84, %p85
      %p87 = scmp.ne.s32.totalorder %s75, %s76
      %p88 = scmp.eq.s32.totalorder %s24, 1
      %p89 = por %p87, %p88
      %p91 = scmp.ne.s32.totalorder %s76, %s90
      %p92 = scmp.eq.s32.totalorder %s24, 0
      %p93 = por %p91, %p92
      %s95 = sadd.s32 %s94, 1
      %p98 = scmp.eq.s32.totalorder %s18, 1
      %p99 = scmp.ne.s32.totalorder %s94, %s96
      %p100 = scmp.eq.s32.totalorder %s18, 0
      %p101 = por %p99, %p100
      %p102 = scmp.ne.s32.totalorder %s94, %s96
      %p103 = scmp.eq.s32.totalorder %s23, 1
      %p104 = por %p102, %p103
      %p105 = scmp.ne.s32.totalorder %s96, %s97
      %p106 = scmp.eq.s32.totalorder %s23, 0
      %p107 = por %p105, %p106
      %p108 = scmp.ne.s32.totalorder %s96, %s97
      %p109 = scmp.eq.s32.totalorder %s24, 1
      %p110 = por %p108, %p109
      %p112 = scmp.ne.s32.totalorder %s97, %s111
      %p113 = scmp.eq.s32.totalorder %s24, 0
      %p114 = por %p112, %p113
      %s116 = sadd.s32 %s115, 1
      %p119 = scmp.eq.s32.totalorder %s18, 1
      %p120 = scmp.ne.s32.totalorder %s115, %s117
      %p121 = scmp.eq.s32.totalorder %s18, 0
      %p122 = por %p120, %p121
      %p123 = scmp.ne.s32.totalorder %s115, %s117
      %p124 = scmp.eq.s32.totalorder %s23, 1
      %p125 = por %p123, %p124
      %p126 = scmp.ne.s32.totalorder %s117, %s118
      %p127 = scmp.eq.s32.totalorder %s23, 0
      %p128 = por %p126, %p127
      %p129 = scmp.ne.s32.totalorder %s117, %s118
      %p130 = scmp.eq.s32.totalorder %s24, 1
      %p131 = por %p129, %p130
      %p133 = scmp.ne.s32.totalorder %s118, %s132
      %p134 = scmp.eq.s32.totalorder %s24, 0
      %p135 = por %p133, %p134
      %s137 = sadd.s32 %s136, 1
      %p140 = scmp.eq.s32.totalorder %s18, 1
      %p141 = scmp.ne.s32.totalorder %s136, %s138
      %p142 = scmp.eq.s32.totalorder %s18, 0
      %p143 = por %p141, %p142
      %p144 = scmp.ne.s32.totalorder %s136, %s138
      %p145 = scmp.eq.s32.totalorder %s23, 1
      %p146 = por %p144, %p145
      %p147 = scmp.ne.s32.totalorder %s138, %s139
      %p148 = scmp.eq.s32.totalorder %s23, 0
      %p149 = por %p147, %p148
      %p150 = scmp.ne.s32.totalorder %s138, %s139
      %p151 = scmp.eq.s32.totalorder %s24, 1
      %p152 = por %p150, %p151
      %p154 = scmp.ne.s32.totalorder %s139, %s153
      %p155 = scmp.eq.s32.totalorder %s24, 0
      %p156 = por %p154, %p155
      %s158 = sadd.s32 %s157, 1
      %p161 = scmp.eq.s32.totalorder %s18, 1
      %p162 = scmp.ne.s32.totalorder %s157, %s159
      %p163 = scmp.eq.s32.totalorder %s18, 0
      %p164 = por %p162, %p163
      %p165 = scmp.ne.s32.totalorder %s157, %s159
      %p166 = scmp.eq.s32.totalorder %s23, 1
      %p167 = por %p165, %p166
      %p168 = scmp.ne.s32.totalorder %s159, %s160
      %p169 = scmp.eq.s32.totalorder %s23, 0
      %p170 = por %p168, %p169
      %p171 = scmp.ne.s32.totalorder %s159, %s160
      %p172 = scmp.eq.s32.totalorder %s24, 1
      %p173 = por %p171, %p172
      %p175 = scmp.ne.s32.totalorder %s160, %s174
      %p176 = scmp.eq.s32.totalorder %s24, 0
      %p177 = por %p175, %p176
      %s179 = sadd.s32 %s178, 1
      %p182 = scmp.eq.s32.totalorder %s18, 1
      %p183 = scmp.ne.s32.totalorder %s178, %s180
      %p184 = scmp.eq.s32.totalorder %s18, 0
      %p185 = por %p183, %p184
      %p186 = scmp.ne.s32.totalorder %s178, %s180
      %p187 = scmp.eq.s32.totalorder %s23, 1
      %p188 = por %p186, %p187
      %p189 = scmp.ne.s32.totalorder %s180, %s181
      %p190 = scmp.eq.s32.totalorder %s23, 0
      %p191 = por %p189, %p190
      %p192 = scmp.ne.s32.totalorder %s180, %s181
      %p193 = scmp.eq.s32.totalorder %s24, 1
      %p194 = por %p192, %p193
      %p196 = scmp.ne.s32.totalorder %s181, %s195
      %p197 = scmp.eq.s32.totalorder %s24, 0
      %p198 = por %p196, %p197
      %s200 = sadd.s32 %s199, 1
      %p203 = scmp.eq.s32.totalorder %s18, 1
      %p204 = scmp.ne.s32.totalorder %s199, %s201
      %p205 = scmp.eq.s32.totalorder %s18, 0
      %p206 = por %p204, %p205
      %p207 = scmp.ne.s32.totalorder %s199, %s201
      %p208 = scmp.eq.s32.totalorder %s23, 1
      %p209 = por %p207, %p208
      %p210 = scmp.ne.s32.totalorder %s201, %s202
      %p211 = scmp.eq.s32.totalorder %s23, 0
      %p212 = por %p210, %p211
      %p213 = scmp.ne.s32.totalorder %s201, %s202
      %p214 = scmp.eq.s32.totalorder %s24, 1
      %p215 = por %p213, %p214
      %p217 = scmp.ne.s32.totalorder %s202, %s216
      %p218 = scmp.eq.s32.totalorder %s24, 0
      %p219 = por %p217, %p218
      %s220 = ssub.s32 %s18, %s25
      %p221 = scmp.eq.s32.totalorder %s220, 0
      %s223 = sadd.s32 %s222, 1
      %s224 = scalar_select %p221, %s222, %s223
      %p227 = pneg %p221
      %p228 = scmp.eq.s32.totalorder %s18, 1
      %p229 = por %p227, %p228
      %p230 = scmp.ne.s32.totalorder %s222, %s225
      %p231 = scmp.eq.s32.totalorder %s18, 0
      %p232 = por %p230, %p231
      %p233 = scmp.ne.s32.totalorder %s222, %s225
      %p234 = scmp.eq.s32.totalorder %s23, 1
      %p235 = por %p233, %p234
      %p236 = scmp.ne.s32.totalorder %s225, %s226
      %p237 = scmp.eq.s32.totalorder %s23, 0
      %p238 = por %p236, %p237
      %p239 = scmp.ne.s32.totalorder %s225, %s226
      %p240 = scmp.eq.s32.totalorder %s24, 1
      %p241 = por %p239, %p240
      %p243 = scmp.ne.s32.totalorder %s226, %s242
      %p244 = scmp.eq.s32.totalorder %s24, 0
      %p245 = por %p243, %p244
      %p246 = scmp.le.s32.totalorder 1, %s18
      %p247 = scmp.lt.s32.totalorder %s18, 3
      %p248 = pnand %p246, %p247
      %p249 = pneg %p248
      // Predicated region
      $region9: #{tpu_custom_call.1} parent=5 // pred_check
        _
      $region10: #{tpu_custom_call.1} parent=5 // pred_check_branch
        %251 = sbr.rel (%p248) target = $region12
      $region11: #{tpu_custom_call.1} parent=5 // pred_region
        %s252 = ssub.s32 %s18, 1
        // Predicated region
        $region13: #{tpu_custom_call.1} parent=11 // pred_check
          %p253 = pneg %p65
        $region14: #{tpu_custom_call.1} parent=11 // pred_check_branch
          %255 = sbr.rel (%p253) target = $region16
        $region15: #{tpu_custom_call.1} parent=11 // pred_region
          _
        $region16: #{tpu_custom_call.1} parent=11 // pred_fallthru
          _
        // Predicated region
        $region17: #{tpu_custom_call.1} parent=11 // pred_check
          %p256 = pneg %p86
        $region18: #{tpu_custom_call.1} parent=11 // pred_check_branch
          %258 = sbr.rel (%p256) target = $region20
        $region19: #{tpu_custom_call.1} parent=11 // pred_region
          _
        $region20: #{tpu_custom_call.1} parent=11 // pred_fallthru
          _
        // Predicated region
        $region21: #{tpu_custom_call.1} parent=11 // pred_check
          %p259 = pneg %p107
        $region22: #{tpu_custom_call.1} parent=11 // pred_check_branch
          %261 = sbr.rel (%p259) target = $region24
        $region23: #{tpu_custom_call.1} parent=11 // pred_region
          _
        $region24: #{tpu_custom_call.1} parent=11 // pred_fallthru
          _
        // Predicated region
        $region25: #{tpu_custom_call.1} parent=11 // pred_check
          %p262 = pneg %p128
        $region26: #{tpu_custom_call.1} parent=11 // pred_check_branch
          %264 = sbr.rel (%p262) target = $region28
        $region27: #{tpu_custom_call.1} parent=11 // pred_region
          _
        $region28: #{tpu_custom_call.1} parent=11 // pred_fallthru
          _
        // Predicated region
        $region29: #{tpu_custom_call.1} parent=11 // pred_check
          %p265 = pneg %p149
        $region30: #{tpu_custom_call.1} parent=11 // pred_check_branch
          %267 = sbr.rel (%p265) target = $region32
        $region31: #{tpu_custom_call.1} parent=11 // pred_region
          _
        $region32: #{tpu_custom_call.1} parent=11 // pred_fallthru
          _
        // Predicated region
        $region33: #{tpu_custom_call.1} parent=11 // pred_check
          %p268 = pneg %p170
        $region34: #{tpu_custom_call.1} parent=11 // pred_check_branch
          %270 = sbr.rel (%p268) target = $region36
        $region35: #{tpu_custom_call.1} parent=11 // pred_region
          _
        $region36: #{tpu_custom_call.1} parent=11 // pred_fallthru
          _
        // Predicated region
        $region37: #{tpu_custom_call.1} parent=11 // pred_check
          %p271 = pneg %p191
        $region38: #{tpu_custom_call.1} parent=11 // pred_check_branch
          %273 = sbr.rel (%p271) target = $region40
        $region39: #{tpu_custom_call.1} parent=11 // pred_region
          _
        $region40: #{tpu_custom_call.1} parent=11 // pred_fallthru
          _
        // Predicated region
        $region41: #{tpu_custom_call.1} parent=11 // pred_check
          %p274 = pneg %p212
        $region42: #{tpu_custom_call.1} parent=11 // pred_check_branch
          %276 = sbr.rel (%p274) target = $region44
        $region43: #{tpu_custom_call.1} parent=11 // pred_region
          _
        $region44: #{tpu_custom_call.1} parent=11 // pred_fallthru
          _
      $region12: #{tpu_custom_call.1} parent=5 // pred_fallthru
        _
      %p277 = scmp.lt.s32.totalorder %s18, 2
      // Predicated region
      $region45: #{tpu_custom_call.1} parent=5 // pred_check
        %p278 = pneg %p277
      $region46: #{tpu_custom_call.1} parent=5 // pred_check_branch
        %280 = sbr.rel (%p278) target = $region48
      $region47: #{tpu_custom_call.1} parent=5 // pred_region
        // Predicated region
        $region49: #{tpu_custom_call.1} parent=47 // pred_check
          %p281 = pneg %p38
        $region50: #{tpu_custom_call.1} parent=47 // pred_check_branch
          %283 = sbr.rel (%p281) target = $region52
        $region51: #{tpu_custom_call.1} parent=47 // pred_region
          %p284 = scmp.lt.s32.totalorder %s18, 1
          %s285 = scalar_select %p284, %s18, 1
          %s286 = smul.addr %s285, 9
          %s287 = smul.addr %s286, 8
          %s288 = scalar_lea.vmem %s0, %s287
        $region52: #{tpu_custom_call.1} parent=47 // pred_fallthru
          _
      $region48: #{tpu_custom_call.1} parent=5 // pred_fallthru
        _
      %p289 = scmp.le.s32.totalorder 1, %s18
      %p290 = scmp.lt.s32.totalorder %s18, 3
      %p291 = pnand %p289, %p290
      %p292 = pneg %p291
      // Predicated region
      $region53: #{tpu_custom_call.1} parent=5 // pred_check
        _
      $region54: #{tpu_custom_call.1} parent=5 // pred_check_branch
        %294 = sbr.rel (%p291) target = $region56
      $region55: #{tpu_custom_call.1} parent=5 // pred_region
        %s295 = ssub.s32 %s18, 1
        %p296 = scmp.lt.s32.totalorder %s23, 1
        %s297 = scalar_select %p296, %s23, 1
        %s298 = smul.addr %s297, 9
        %s299 = smul.addr %s298, 8
        %s300 = scalar_lea.vmem %s0, %s299
        %p301 = pneg %p44
        %p302 = pneg %p41
        %p303 = pneg %p65
        %p304 = pneg %p62
        %p305 = pneg %p86
        %p306 = pneg %p83
        %p307 = pneg %p107
        %p308 = pneg %p104
        %p309 = pneg %p128
        %p310 = pneg %p125
        %p311 = pneg %p149
        %p312 = pneg %p146
        %p313 = pneg %p170
        %p314 = pneg %p167
        %p315 = pneg %p191
        %p316 = pneg %p188
        %p317 = pneg %p212
        %p318 = pneg %p209
        %p319 = pneg %p238
        %p320 = pneg %p235
        %s321 = sand.u32 %s225, 1
        %s322 = scalar_lea.sflag [#allocation3], %s321
        %s323 = sand.u32 %s225, 1
        %s324 = smul.addr %s323, 64
        %s325 = scalar_lea.vmem [#allocation2], %s324
        %p326 = scmp.lt.s32.totalorder %s23, 1
        %s327 = scalar_select %p326, %s23, 1
        %s328 = smul.addr %s327, 9
        %s329 = smul.addr %s328, 8
        %s330 = scalar_lea.vmem %s0, %s329
        %v332 = vld [vmem:[%s330] sm:$0xff]
        %v333 = vld [vmem:[%s330 + $0x8] sm:$0xff]
        %v334 = vld [vmem:[%s330 + $0x10] sm:$0xff]
        %v335 = vld [vmem:[%s330 + $0x18] sm:$0xff]
        %v336 = vld [vmem:[%s330 + $0x20] sm:$0xff]
        %v337 = vld [vmem:[%s330 + $0x28] sm:$0xff]
        %v338 = vld [vmem:[%s330 + $0x30] sm:$0xff]
        %v339 = vld [vmem:[%s330 + $0x38] sm:$0xff]
        %v340 = vld [vmem:[%s330 + $0x40] sm:$0x3f]
        %v341 = vpack.c.bf16 %v333, %v332
        %v342 = vpack.c.bf16 %v335, %v334
        %v343 = vpack.c.bf16 %v337, %v336
        %v344 = vpack.c.bf16 %v339, %v338
        %v345 = vpack.c.bf16 %v340, %v340
        %vm346 = vsmask.f32 7424
        %v348 = vshrl.u32 %v341, 16
        %v350 = vshll.u32 %v341, 16
        %v352 = vrot.slane %v350, 1
        %v353 = vor.u32 %v348, %v352
        %v355 = vshll.u32 %v342, 16
        %v357 = vrot.slane %v355, 1
        %v358 = vsel %vm346, %v353, %v357
        %v359 = vshrl.u32 %v342, 16
        %v361 = vor.u32 %v359, %v357
        %v363 = vshll.u32 %v343, 16
        %v365 = vrot.slane %v363, 1
        %v366 = vsel %vm346, %v361, %v365
        %v367 = vshrl.u32 %v343, 16
        %v369 = vor.u32 %v367, %v365
        %v371 = vshll.u32 %v344, 16
        %v373 = vrot.slane %v371, 1
        %v374 = vsel %vm346, %v369, %v373
        %v375 = vshrl.u32 %v344, 16
        %v377 = vor.u32 %v375, %v373
        %v379 = vshll.u32 %v345, 16
        %v381 = vrot.slane %v379, 1
        %v382 = vsel %vm346, %v377, %v381
        %383 = vrot.lane.b32.xlu0 %v358, 32
        %v384 = vpop.permute.xlu0 %383
        %385 = vrot.lane.b32.xlu0 %v366, 32
        %v386 = vpop.permute.xlu0 %385
        %387 = vrot.lane.b32.xlu0 %v374, 32
        %v388 = vpop.permute.xlu0 %387
        %389 = vrot.lane.b32.xlu0 %v382, 32
        %v390 = vpop.permute.xlu0 %389
        %vm396 = vcmask 1046528
        %v397 = vrot.slane %v341, 1
        %v398 = vrot.slane %v342, 1
        %v399 = vsel %vm396, %v397, %v398
        %v400 = vrot.slane %v343, 1
        %v401 = vsel %vm396, %v398, %v400
        %v402 = vrot.slane %v344, 1
        %v403 = vsel %vm396, %v400, %v402
        %v404 = vrot.slane %v345, 1
        %v405 = vsel %vm396, %v402, %v404
        %406 = vrot.lane.b32.xlu0 %v399, 64
        %v407 = vpop.permute.xlu0 %406
        %408 = vrot.lane.b32.xlu0 %v401, 64
        %v409 = vpop.permute.xlu0 %408
        %410 = vrot.lane.b32.xlu0 %v403, 64
        %v411 = vpop.permute.xlu0 %410
        %412 = vrot.lane.b32.xlu0 %v405, 64
        %v413 = vpop.permute.xlu0 %412
        %vm414 = vsmask.f32 6400
        %v415 = vrot.slane %v348, 1
        %v416 = vrot.slane %v350, 2
        %v417 = vor.u32 %v415, %v416
        %v418 = vrot.slane %v359, 1
        %v419 = vrot.slane %v355, 2
        %v420 = vor.u32 %v418, %v419
        %v421 = vsel %vm414, %v417, %v420
        %v422 = vrot.slane %v367, 1
        %v423 = vrot.slane %v363, 2
        %v424 = vor.u32 %v422, %v423
        %v425 = vsel %vm414, %v420, %v424
        %v426 = vrot.slane %v375, 1
        %v427 = vrot.slane %v371, 2
        %v428 = vor.u32 %v426, %v427
        %v429 = vsel %vm414, %v424, %v428
        %v430 = vshrl.u32 %v345, 16
        %v432 = vrot.slane %v430, 1
        %v433 = vrot.slane %v379, 2
        %v434 = vor.u32 %v432, %v433
        %v435 = vsel %vm414, %v428, %v434
        %436 = vrot.lane.b32.xlu0 %v421, 96
        %v437 = vpop.permute.xlu0 %436
        %438 = vrot.lane.b32.xlu0 %v425, 96
        %v439 = vpop.permute.xlu0 %438
        %440 = vrot.lane.b32.xlu0 %v429, 96
        %v441 = vpop.permute.xlu0 %440
        %442 = vrot.lane.b32.xlu0 %v435, 96
        %v443 = vpop.permute.xlu0 %442
        %vm444 = vcmask 1045504
        %v445 = vrot.slane %v341, 2
        %v446 = vrot.slane %v342, 2
        %v447 = vsel %vm444, %v445, %v446
        %v448 = vrot.slane %v343, 2
        %v449 = vsel %vm444, %v446, %v448
        %v450 = vrot.slane %v344, 2
        %v451 = vsel %vm444, %v448, %v450
        %v452 = vrot.slane %v345, 2
        %v453 = vsel %vm444, %v450, %v452
        %vm454 = vsmask.f32 5376
        %v455 = vrot.slane %v348, 2
        %v456 = vrot.slane %v350, 3
        %v457 = vor.u32 %v455, %v456
        %v458 = vrot.slane %v359, 2
        %v459 = vrot.slane %v355, 3
        %v460 = vor.u32 %v458, %v459
        %v461 = vsel %vm454, %v457, %v460
        %v462 = vrot.slane %v367, 2
        %v463 = vrot.slane %v363, 3
        %v464 = vor.u32 %v462, %v463
        %v465 = vsel %vm454, %v460, %v464
        %v466 = vrot.slane %v375, 2
        %v467 = vrot.slane %v371, 3
        %v468 = vor.u32 %v466, %v467
        %v469 = vsel %vm454, %v464, %v468
        %v470 = vrot.slane %v430, 2
        %v471 = vrot.slane %v379, 3
        %v472 = vor.u32 %v470, %v471
        %v473 = vsel %vm454, %v468, %v472
        %474 = vrot.lane.b32.xlu0 %v461, 32
        %v475 = vpop.permute.xlu0 %474
        %476 = vrot.lane.b32.xlu0 %v465, 32
        %v477 = vpop.permute.xlu0 %476
        %478 = vrot.lane.b32.xlu0 %v469, 32
        %v479 = vpop.permute.xlu0 %478
        %480 = vrot.lane.b32.xlu0 %v473, 32
        %v481 = vpop.permute.xlu0 %480
        %vm482 = vcmask 1044480
        %v483 = vrot.slane %v341, 3
        %v484 = vrot.slane %v342, 3
        %v485 = vsel %vm482, %v483, %v484
        %v486 = vrot.slane %v343, 3
        %v487 = vsel %vm482, %v484, %v486
        %v488 = vrot.slane %v344, 3
        %v489 = vsel %vm482, %v486, %v488
        %v490 = vrot.slane %v345, 3
        %v491 = vsel %vm482, %v488, %v490
        %492 = vrot.lane.b32.xlu0 %v485, 64
        %v493 = vpop.permute.xlu0 %492
        %494 = vrot.lane.b32.xlu0 %v487, 64
        %v495 = vpop.permute.xlu0 %494
        %496 = vrot.lane.b32.xlu0 %v489, 64
        %v497 = vpop.permute.xlu0 %496
        %498 = vrot.lane.b32.xlu0 %v491, 64
        %v499 = vpop.permute.xlu0 %498
        %vm500 = vcmask 261120
        %v502 = vsel %vm500, %v341, %v384
        %v504 = vsel %vm500, %v342, %v386
        %v506 = vsel %vm500, %v343, %v388
        %v508 = vsel %vm500, %v344, %v390
        %vm509 = vcmask 523264
        %v511 = vsel %vm509, %v502, %v407
        %v513 = vsel %vm509, %v504, %v409
        %v515 = vsel %vm509, %v506, %v411
        %v517 = vsel %vm509, %v508, %v413
        %vm518 = vcmask 785408
        %v520 = vsel %vm518, %v511, %v437
        %v523 = vsel %vm518, %v513, %v439
        %v526 = vsel %vm518, %v515, %v441
        %v529 = vsel %vm518, %v517, %v443
        %v533 = vsel %vm500, %v447, %v475
        %v536 = vsel %vm500, %v449, %v477
        %v539 = vsel %vm500, %v451, %v479
        %v542 = vsel %vm500, %v453, %v481
        %v544 = vsel %vm509, %v533, %v493
        %v546 = vsel %vm509, %v536, %v495
        %v548 = vsel %vm509, %v539, %v497
        %v550 = vsel %vm509, %v542, %v499
        %v551 = vld [vmem:[%s1] sm:$0xf]
        %v552 = vld [vmem:[%s1 + $0x4] sm:$0xf]
        %v553 = vld [vmem:[%s1 + $0x8] sm:$0xf]
        %v554 = vld [vmem:[%s1 + $0xc] sm:$0xf]
        %v555 = vld [vmem:[%s1 + $0x10] sm:$0xf]
        %v556 = vld [vmem:[%s1 + $0x14] sm:$0xf]
        %v557 = vld [vmem:[%s1 + $0x18] sm:$0xf]
        %v558 = vld [vmem:[%s1 + $0x1c] sm:$0xf]
        %v559 = vld [vmem:[%s1 + $0x20] sm:$0xf]
        %v560 = vld [vmem:[%s1 + $0x24] sm:$0xf]
        %v561 = vld [vmem:[%s1 + $0x28] sm:$0xf]
        %v562 = vld [vmem:[%s1 + $0x2c] sm:$0xf]
        %v563 = vld [vmem:[%s1 + $0x30] sm:$0xf]
        %v564 = vld [vmem:[%s1 + $0x34] sm:$0xf]
        %v565 = vld [vmem:[%s1 + $0x38] sm:$0xf]
        %v566 = vld [vmem:[%s1 + $0x3c] sm:$0xf]
        %v567 = vld [vmem:[%s1 + $0x40] sm:$0xf]
        %v568 = vld [vmem:[%s1 + $0x44] sm:$0xf]
        %v569 = vld [vmem:[%s1 + $0x48] sm:$0xf]
        %v570 = vld [vmem:[%s1 + $0x4c] sm:$0xf]
        %v571 = vld [vmem:[%s1 + $0x50] sm:$0xf]
        %v572 = vld [vmem:[%s1 + $0x54] sm:$0xf]
        %v573 = vld [vmem:[%s1 + $0x58] sm:$0xf]
        %v574 = vld [vmem:[%s1 + $0x5c] sm:$0xf]
        %v575 = vld [vmem:[%s1 + $0x60] sm:$0xf]
        %v576 = vld [vmem:[%s1 + $0x64] sm:$0xf]
        %v577 = vld [vmem:[%s1 + $0x68] sm:$0xf]
        %v578 = vld [vmem:[%s1 + $0x6c] sm:$0xf]
        %v607 = vunpack.c.l.b16 %v551
        %v608 = vunpack.c.l.b16 %v552
        %v609 = vunpack.c.l.b16 %v553
        %v610 = vunpack.c.l.b16 %v554
        %v611 = vunpack.c.l.b16 %v555
        %v612 = vunpack.c.l.b16 %v556
        %v613 = vunpack.c.l.b16 %v557
        %v614 = vunpack.c.l.b16 %v558
        %v615 = vunpack.c.l.b16 %v559
        %v616 = vunpack.c.l.b16 %v560
        %v617 = vunpack.c.l.b16 %v561
        %v618 = vunpack.c.l.b16 %v562
        %v619 = vunpack.c.l.b16 %v563
        %v620 = vunpack.c.l.b16 %v564
        %v621 = vunpack.c.l.b16 %v565
        %v622 = vunpack.c.l.b16 %v566
        %v623 = vunpack.c.l.b16 %v567
        %v624 = vunpack.c.l.b16 %v568
        %v625 = vunpack.c.l.b16 %v569
        %v626 = vunpack.c.l.b16 %v570
        %v627 = vunpack.c.l.b16 %v571
        %v628 = vunpack.c.l.b16 %v572
        %v629 = vunpack.c.l.b16 %v573
        %v630 = vunpack.c.l.b16 %v574
        %v631 = vunpack.c.l.b16 %v575
        %v632 = vunpack.c.l.b16 %v576
        %v633 = vunpack.c.l.b16 %v577
        %v634 = vunpack.c.l.b16 %v578
        %v635 = vpack.c.b16 %v608, %v607
        %v636 = vpack.c.b16 %v610, %v609
        %v637 = vpack.c.b16 %v612, %v611
        %v638 = vpack.c.b16 %v614, %v613
        %v639 = vpack.c.b16 %v616, %v615
        %v640 = vpack.c.b16 %v618, %v617
        %v641 = vpack.c.b16 %v620, %v619
        %v642 = vpack.c.b16 %v622, %v621
        %v643 = vpack.c.b16 %v624, %v623
        %v644 = vpack.c.b16 %v626, %v625
        %v645 = vpack.c.b16 %v628, %v627
        %v646 = vpack.c.b16 %v630, %v629
        %v647 = vpack.c.b16 %v632, %v631
        %v648 = vpack.c.b16 %v634, %v633
        %v663 = vsel %vm518, %v544, 0
        %v665 = vsel %vm518, %v546, 0
        %v667 = vsel %vm518, %v548, 0
        %v669 = vsel %vm518, %v550, 0
        %671 = vmatprep.subr.bf16.mxu0 0
        %672 = vmatpush1.bf16.msra.mxu0 %v635
        %673 = vmatprep.subr.bf16.mxu0 0
        %674 = vmatpush1.bf16.msra.mxu0 %v636
        %675 = vmatprep.subr.bf16.mxu0 0
        %676 = vmatpush1.bf16.msra.mxu0 %v637
        %677 = vmatprep.subr.bf16.mxu0 0
        %678 = vmatpush1.bf16.msra.mxu0 %v638
        %679 = vmatprep.subr.bf16.mxu0 0
        %680 = vmatpush1.bf16.msra.mxu0 %v639
        %681 = vmatprep.subr.bf16.mxu0 0
        %682 = vmatpush1.bf16.msra.mxu0 %v640
        %683 = vmatprep.subr.bf16.mxu0 0
        %684 = vmatpush1.bf16.msra.mxu0 %v641
        %685 = vmatprep.subr.bf16.mxu0 0
        %686 = vmatpush1.bf16.msra.mxu0 %v642
        %687 = vmatprep.subr.bf16.mxu0 0
        %688 = vmatpush1.bf16.msra.mxu0 %v643
        %689 = vmatprep.subr.bf16.mxu0 0
        %690 = vmatpush1.bf16.msra.mxu0 %v644
        %691 = vmatprep.subr.bf16.mxu0 0
        %692 = vmatpush1.bf16.msra.mxu0 %v645
        %693 = vmatprep.subr.bf16.mxu0 0
        %694 = vmatpush1.bf16.msra.mxu0 %v646
        %695 = vmatprep.subr.bf16.mxu0 0
        %696 = vmatpush1.bf16.msra.mxu0 %v647
        %697 = vmatprep.subr.bf16.mxu0 0
        %698 = vmatpush1.bf16.msra.mxu0 %v648
        %699 = vmatprep.subr.bf16.mxu0 0
        %700 = vmatpush1.bf16.msra.mxu0 0
        %701 = vmatprep.subr.bf16.mxu0 0
        %702 = vmatpush1.bf16.msra.mxu0 0
        %703 = vmatprep.mubr.bf16.mxu0 %v663
        %704 = vmatmul.mubr.bf16.gmra.mrb[0].mxu0 %v520
        %v705 = vpop.f32.mrb[0].mxu0
        %v706 = vadd.f32 0.0, %v705
        %v707 = vpop.f32.mrb[0].mxu0
        %v708 = vpop.f32.mrb[0].mxu0
        %v709 = vadd.f32 0.0, %v708
        %v710 = vpop.f32.mrb[0].mxu0
        %711 = vmatprep.mubr.bf16.mxu0 %v665
        %712 = vmatmul.mubr.bf16.gmra.mrb[0].mxu0 %v523
        %v713 = vpop.f32.mrb[0].mxu0
        %v714 = vadd.f32 0.0, %v713
        %v715 = vpop.f32.mrb[0].mxu0
        %v716 = vpop.f32.mrb[0].mxu0
        %v717 = vadd.f32 0.0, %v716
        %v718 = vpop.f32.mrb[0].mxu0
        %719 = vmatprep.mubr.bf16.mxu0 %v667
        %720 = vmatmul.mubr.bf16.gmra.mrb[0].mxu0 %v526
        %v721 = vpop.f32.mrb[0].mxu0
        %v722 = vadd.f32 0.0, %v721
        %v723 = vpop.f32.mrb[0].mxu0
        %v724 = vpop.f32.mrb[0].mxu0
        %v725 = vadd.f32 0.0, %v724
        %v726 = vpop.f32.mrb[0].mxu0
        %727 = vmatprep.mubr.bf16.mxu0 %v669
        %728 = vmatmul.mubr.bf16.gmra.mrb[0].mxu0 %v529
        %v729 = vpop.f32.mrb[0].mxu0
        %v730 = vadd.f32 0.0, %v729
        %v731 = vpop.f32.mrb[0].mxu0
        %v732 = vpop.f32.mrb[0].mxu0
        %v733 = vadd.f32 0.0, %v732
        %v734 = vpop.f32.mrb[0].mxu0
        %735 = vdwg.mxu0
        %v736 = vld [vmem:[%s2] sm:$0x1]
        %v738 = vlaneseq
        %v739 = vshrl.u32 %v738, 7
        %v740 = vsub.s32 0, %v739
        %v741 = vrot.slane %v736, %v740
        %v743 = vmul.f32 %v706, %v741
        %v744 = vmul.f32 %v709, %v741
        %v745 = vmul.f32 %v714, %v741
        %v746 = vmul.f32 %v717, %v741
        %v747 = vmul.f32 %v722, %v741
        %v748 = vmul.f32 %v725, %v741
        %v749 = vmul.f32 %v730, %v741
        %v750 = vmul.f32 %v733, %v741
        %v751 = vld [vmem:[%s3] sm:$0x1]
        %v753 = vlaneseq
        %v754 = vshrl.u32 %v753, 7
        %v755 = vsub.s32 0, %v754
        %v756 = vrot.slane %v751, %v755
        %v758 = vadd.f32 %v743, %v756
        %v759 = vadd.f32 %v744, %v756
        %v760 = vadd.f32 %v745, %v756
        %v761 = vadd.f32 %v746, %v756
        %v762 = vadd.f32 %v747, %v756
        %v763 = vadd.f32 %v748, %v756
        %v764 = vadd.f32 %v749, %v756
        %v765 = vadd.f32 %v750, %v756
        %v766 = vmax.f32 %v758, 0.0
        %v767 = vmax.f32 %v759, 0.0
        %v768 = vmax.f32 %v760, 0.0
        %v769 = vmax.f32 %v761, 0.0
        %v770 = vmax.f32 %v762, 0.0
        %v771 = vmax.f32 %v763, 0.0
        %v772 = vmax.f32 %v764, 0.0
        %v773 = vmax.f32 %v765, 0.0
        %vm782 = vcmask 1042432
        %v783 = vrot.slane %v766, 5
        %v784 = vrot.slane %v767, 5
        %v785 = vsel %vm782, %v783, %v784
        %v786 = vrot.slane %v768, 5
        %v787 = vsel %vm782, %v784, %v786
        %v788 = vrot.slane %v769, 5
        %v789 = vsel %vm782, %v786, %v788
        %v790 = vrot.slane %v770, 5
        %v791 = vsel %vm782, %v788, %v790
        %v792 = vrot.slane %v771, 5
        %v793 = vsel %vm782, %v790, %v792
        %v794 = vrot.slane %v772, 5
        %v795 = vsel %vm782, %v792, %v794
        %v796 = vrot.slane %v773, 5
        %v797 = vsel %vm782, %v794, %v796
        %v807 = vsel %vm782, 0.0, %v783
        %v808 = vsel %vm782, %v796, 0.0
        %v809 = vpack.c.bf16 %v785, %v807
        %v810 = vpack.c.bf16 %v789, %v787
        %v811 = vpack.c.bf16 %v793, %v791
        %v812 = vpack.c.bf16 %v797, %v795
        %v813 = vpack.c.bf16 %v808, %v808
        %v815 = vshrl.u32 %v809, 16
        %v817 = vshll.u32 %v809, 16
        %v819 = vrot.slane %v817, 1
        %v820 = vor.u32 %v815, %v819
        %v822 = vshll.u32 %v810, 16
        %v824 = vrot.slane %v822, 1
        %v825 = vsel %vm346, %v820, %v824
        %v826 = vshrl.u32 %v810, 16
        %v828 = vor.u32 %v826, %v824
        %v830 = vshll.u32 %v811, 16
        %v832 = vrot.slane %v830, 1
        %v833 = vsel %vm346, %v828, %v832
        %v834 = vshrl.u32 %v811, 16
        %v836 = vor.u32 %v834, %v832
        %v838 = vshll.u32 %v812, 16
        %v840 = vrot.slane %v838, 1
        %v841 = vsel %vm346, %v836, %v840
        %v842 = vshrl.u32 %v812, 16
        %v844 = vor.u32 %v842, %v840
        %v846 = vshll.u32 %v813, 16
        %v848 = vrot.slane %v846, 1
        %v849 = vsel %vm346, %v844, %v848
        %850 = vrot.lane.b32.xlu0 %v825, 32
        %v851 = vpop.permute.xlu0 %850
        %852 = vrot.lane.b32.xlu0 %v833, 32
        %v853 = vpop.permute.xlu0 %852
        %854 = vrot.lane.b32.xlu0 %v841, 32
        %v855 = vpop.permute.xlu0 %854
        %856 = vrot.lane.b32.xlu0 %v849, 32
        %v857 = vpop.permute.xlu0 %856
        %v863 = vrot.slane %v809, 1
        %v864 = vrot.slane %v810, 1
        %v865 = vsel %vm396, %v863, %v864
        %v866 = vrot.slane %v811, 1
        %v867 = vsel %vm396, %v864, %v866
        %v868 = vrot.slane %v812, 1
        %v869 = vsel %vm396, %v866, %v868
        %v870 = vrot.slane %v813, 1
        %v871 = vsel %vm396, %v868, %v870
        %872 = vrot.lane.b32.xlu0 %v865, 64
        %v873 = vpop.permute.xlu0 %872
        %874 = vrot.lane.b32.xlu0 %v867, 64
        %v875 = vpop.permute.xlu0 %874
        %876 = vrot.lane.b32.xlu0 %v869, 64
        %v877 = vpop.permute.xlu0 %876
        %878 = vrot.lane.b32.xlu0 %v871, 64
        %v879 = vpop.permute.xlu0 %878
        %v880 = vrot.slane %v815, 1
        %v881 = vrot.slane %v817, 2
        %v882 = vor.u32 %v880, %v881
        %v883 = vrot.slane %v826, 1
        %v884 = vrot.slane %v822, 2
        %v885 = vor.u32 %v883, %v884
        %v886 = vsel %vm414, %v882, %v885
        %v887 = vrot.slane %v834, 1
        %v888 = vrot.slane %v830, 2
        %v889 = vor.u32 %v887, %v888
        %v890 = vsel %vm414, %v885, %v889
        %v891 = vrot.slane %v842, 1
        %v892 = vrot.slane %v838, 2
        %v893 = vor.u32 %v891, %v892
        %v894 = vsel %vm414, %v889, %v893
        %v895 = vshrl.u32 %v813, 16
        %v897 = vrot.slane %v895, 1
        %v898 = vrot.slane %v846, 2
        %v899 = vor.u32 %v897, %v898
        %v900 = vsel %vm414, %v893, %v899
        %901 = vrot.lane.b32.xlu0 %v886, 96
        %v902 = vpop.permute.xlu0 %901
        %903 = vrot.lane.b32.xlu0 %v890, 96
        %v904 = vpop.permute.xlu0 %903
        %905 = vrot.lane.b32.xlu0 %v894, 96
        %v906 = vpop.permute.xlu0 %905
        %907 = vrot.lane.b32.xlu0 %v900, 96
        %v908 = vpop.permute.xlu0 %907
        %v909 = vrot.slane %v809, 2
        %v910 = vrot.slane %v810, 2
        %v911 = vsel %vm444, %v909, %v910
        %v912 = vrot.slane %v811, 2
        %v913 = vsel %vm444, %v910, %v912
        %v914 = vrot.slane %v812, 2
        %v915 = vsel %vm444, %v912, %v914
        %v916 = vrot.slane %v813, 2
        %v917 = vsel %vm444, %v914, %v916
        %v918 = vrot.slane %v815, 2
        %v919 = vrot.slane %v817, 3
        %v920 = vor.u32 %v918, %v919
        %v921 = vrot.slane %v826, 2
        %v922 = vrot.slane %v822, 3
        %v923 = vor.u32 %v921, %v922
        %v924 = vsel %vm454, %v920, %v923
        %v925 = vrot.slane %v834, 2
        %v926 = vrot.slane %v830, 3
        %v927 = vor.u32 %v925, %v926
        %v928 = vsel %vm454, %v923, %v927
        %v929 = vrot.slane %v842, 2
        %v930 = vrot.slane %v838, 3
        %v931 = vor.u32 %v929, %v930
        %v932 = vsel %vm454, %v927, %v931
        %v933 = vrot.slane %v895, 2
        %v934 = vrot.slane %v846, 3
        %v935 = vor.u32 %v933, %v934
        %v936 = vsel %vm454, %v931, %v935
        %937 = vrot.lane.b32.xlu0 %v924, 32
        %v938 = vpop.permute.xlu0 %937
        %939 = vrot.lane.b32.xlu0 %v928, 32
        %v940 = vpop.permute.xlu0 %939
        %941 = vrot.lane.b32.xlu0 %v932, 32
        %v942 = vpop.permute.xlu0 %941
        %943 = vrot.lane.b32.xlu0 %v936, 32
        %v944 = vpop.permute.xlu0 %943
        %v945 = vrot.slane %v809, 3
        %v946 = vrot.slane %v810, 3
        %v947 = vsel %vm482, %v945, %v946
        %v948 = vrot.slane %v811, 3
        %v949 = vsel %vm482, %v946, %v948
        %v950 = vrot.slane %v812, 3
        %v951 = vsel %vm482, %v948, %v950
        %v952 = vrot.slane %v813, 3
        %v953 = vsel %vm482, %v950, %v952
        %954 = vrot.lane.b32.xlu0 %v947, 64
        %v955 = vpop.permute.xlu0 %954
        %956 = vrot.lane.b32.xlu0 %v949, 64
        %v957 = vpop.permute.xlu0 %956
        %958 = vrot.lane.b32.xlu0 %v951, 64
        %v959 = vpop.permute.xlu0 %958
        %960 = vrot.lane.b32.xlu0 %v953, 64
        %v961 = vpop.permute.xlu0 %960
        %v963 = vsel %vm500, %v809, %v851
        %v965 = vsel %vm500, %v810, %v853
        %v967 = vsel %vm500, %v811, %v855
        %v969 = vsel %vm500, %v812, %v857
        %v971 = vsel %vm509, %v963, %v873
        %v973 = vsel %vm509, %v965, %v875
        %v975 = vsel %vm509, %v967, %v877
        %v977 = vsel %vm509, %v969, %v879
        %v979 = vsel %vm518, %v971, %v902
        %v982 = vsel %vm518, %v973, %v904
        %v985 = vsel %vm518, %v975, %v906
        %v988 = vsel %vm518, %v977, %v908
        %v992 = vsel %vm500, %v911, %v938
        %v995 = vsel %vm500, %v913, %v940
        %v998 = vsel %vm500, %v915, %v942
        %v1001 = vsel %vm500, %v917, %v944
        %v1003 = vsel %vm509, %v992, %v955
        %v1005 = vsel %vm509, %v995, %v957
        %v1007 = vsel %vm509, %v998, %v959
        %v1009 = vsel %vm509, %v1001, %v961
        %v1010 = vld [vmem:[%s4] sm:$0xf]
        %v1011 = vld [vmem:[%s4 + $0x4] sm:$0xf]
        %v1012 = vld [vmem:[%s4 + $0x8] sm:$0xf]
        %v1013 = vld [vmem:[%s4 + $0xc] sm:$0xf]
        %v1014 = vld [vmem:[%s4 + $0x10] sm:$0xf]
        %v1015 = vld [vmem:[%s4 + $0x14] sm:$0xf]
        %v1016 = vld [vmem:[%s4 + $0x18] sm:$0xf]
        %v1017 = vld [vmem:[%s4 + $0x1c] sm:$0xf]
        %v1018 = vld [vmem:[%s4 + $0x20] sm:$0xf]
        %v1019 = vld [vmem:[%s4 + $0x24] sm:$0xf]
        %v1020 = vld [vmem:[%s4 + $0x28] sm:$0xf]
        %v1021 = vld [vmem:[%s4 + $0x2c] sm:$0xf]
        %v1022 = vld [vmem:[%s4 + $0x30] sm:$0xf]
        %v1023 = vld [vmem:[%s4 + $0x34] sm:$0xf]
        %v1024 = vld [vmem:[%s4 + $0x38] sm:$0xf]
        %v1025 = vld [vmem:[%s4 + $0x3c] sm:$0xf]
        %v1026 = vld [vmem:[%s4 + $0x40] sm:$0xf]
        %v1027 = vld [vmem:[%s4 + $0x44] sm:$0xf]
        %v1028 = vld [vmem:[%s4 + $0x48] sm:$0xf]
        %v1029 = vld [vmem:[%s4 + $0x4c] sm:$0xf]
        %v1030 = vld [vmem:[%s4 + $0x50] sm:$0xf]
        %v1031 = vld [vmem:[%s4 + $0x54] sm:$0xf]
        %v1032 = vld [vmem:[%s4 + $0x58] sm:$0xf]
        %v1033 = vld [vmem:[%s4 + $0x5c] sm:$0xf]
        %v1034 = vld [vmem:[%s4 + $0x60] sm:$0xf]
        %v1035 = vld [vmem:[%s4 + $0x64] sm:$0xf]
        %v1036 = vld [vmem:[%s4 + $0x68] sm:$0xf]
        %v1037 = vld [vmem:[%s4 + $0x6c] sm:$0xf]
        %v1066 = vunpack.c.l.b16 %v1010
        %v1067 = vunpack.c.l.b16 %v1011
        %v1068 = vunpack.c.l.b16 %v1012
        %v1069 = vunpack.c.l.b16 %v1013
        %v1070 = vunpack.c.l.b16 %v1014
        %v1071 = vunpack.c.l.b16 %v1015
        %v1072 = vunpack.c.l.b16 %v1016
        %v1073 = vunpack.c.l.b16 %v1017
        %v1074 = vunpack.c.l.b16 %v1018
        %v1075 = vunpack.c.l.b16 %v1019
        %v1076 = vunpack.c.l.b16 %v1020
        %v1077 = vunpack.c.l.b16 %v1021
        %v1078 = vunpack.c.l.b16 %v1022
        %v1079 = vunpack.c.l.b16 %v1023
        %v1080 = vunpack.c.l.b16 %v1024
        %v1081 = vunpack.c.l.b16 %v1025
        %v1082 = vunpack.c.l.b16 %v1026
        %v1083 = vunpack.c.l.b16 %v1027
        %v1084 = vunpack.c.l.b16 %v1028
        %v1085 = vunpack.c.l.b16 %v1029
        %v1086 = vunpack.c.l.b16 %v1030
        %v1087 = vunpack.c.l.b16 %v1031
        %v1088 = vunpack.c.l.b16 %v1032
        %v1089 = vunpack.c.l.b16 %v1033
        %v1090 = vunpack.c.l.b16 %v1034
        %v1091 = vunpack.c.l.b16 %v1035
        %v1092 = vunpack.c.l.b16 %v1036
        %v1093 = vunpack.c.l.b16 %v1037
        %v1094 = vpack.c.b16 %v1067, %v1066
        %v1095 = vpack.c.b16 %v1069, %v1068
        %v1096 = vpack.c.b16 %v1071, %v1070
        %v1097 = vpack.c.b16 %v1073, %v1072
        %v1098 = vpack.c.b16 %v1075, %v1074
        %v1099 = vpack.c.b16 %v1077, %v1076
        %v1100 = vpack.c.b16 %v1079, %v1078
        %v1101 = vpack.c.b16 %v1081, %v1080
        %v1102 = vpack.c.b16 %v1083, %v1082
        %v1103 = vpack.c.b16 %v1085, %v1084
        %v1104 = vpack.c.b16 %v1087, %v1086
        %v1105 = vpack.c.b16 %v1089, %v1088
        %v1106 = vpack.c.b16 %v1091, %v1090
        %v1107 = vpack.c.b16 %v1093, %v1092
        %v1122 = vsel %vm518, %v1003, 0
        %v1124 = vsel %vm518, %v1005, 0
        %v1126 = vsel %vm518, %v1007, 0
        %v1128 = vsel %vm518, %v1009, 0
        %1130 = vmatprep.subr.bf16.mxu0 0
        %1131 = vmatpush1.bf16.msra.mxu0 %v1094
        %1132 = vmatprep.subr.bf16.mxu0 0
        %1133 = vmatpush1.bf16.msra.mxu0 %v1095
        %1134 = vmatprep.subr.bf16.mxu0 0
        %1135 = vmatpush1.bf16.msra.mxu0 %v1096
        %1136 = vmatprep.subr.bf16.mxu0 0
        %1137 = vmatpush1.bf16.msra.mxu0 %v1097
        %1138 = vmatprep.subr.bf16.mxu0 0
        %1139 = vmatpush1.bf16.msra.mxu0 %v1098
        %1140 = vmatprep.subr.bf16.mxu0 0
        %1141 = vmatpush1.bf16.msra.mxu0 %v1099
        %1142 = vmatprep.subr.bf16.mxu0 0
        %1143 = vmatpush1.bf16.msra.mxu0 %v1100
        %1144 = vmatprep.subr.bf16.mxu0 0
        %1145 = vmatpush1.bf16.msra.mxu0 %v1101
        %1146 = vmatprep.subr.bf16.mxu0 0
        %1147 = vmatpush1.bf16.msra.mxu0 %v1102
        %1148 = vmatprep.subr.bf16.mxu0 0
        %1149 = vmatpush1.bf16.msra.mxu0 %v1103
        %1150 = vmatprep.subr.bf16.mxu0 0
        %1151 = vmatpush1.bf16.msra.mxu0 %v1104
        %1152 = vmatprep.subr.bf16.mxu0 0
        %1153 = vmatpush1.bf16.msra.mxu0 %v1105
        %1154 = vmatprep.subr.bf16.mxu0 0
        %1155 = vmatpush1.bf16.msra.mxu0 %v1106
        %1156 = vmatprep.subr.bf16.mxu0 0
        %1157 = vmatpush1.bf16.msra.mxu0 %v1107
        %1158 = vmatprep.subr.bf16.mxu0 0
        %1159 = vmatpush1.bf16.msra.mxu0 0
        %1160 = vmatprep.subr.bf16.mxu0 0
        %1161 = vmatpush1.bf16.msra.mxu0 0
        %1162 = vmatprep.mubr.bf16.mxu0 %v1122
        %1163 = vmatmul.mubr.bf16.gmra.mrb[0].mxu0 %v979
        %v1164 = vpop.f32.mrb[0].mxu0
        %v1165 = vadd.f32 0.0, %v1164
        %v1166 = vpop.f32.mrb[0].mxu0
        %v1167 = vpop.f32.mrb[0].mxu0
        %v1168 = vadd.f32 0.0, %v1167
        %v1169 = vpop.f32.mrb[0].mxu0
        %1170 = vmatprep.mubr.bf16.mxu0 %v1124
        %1171 = vmatmul.mubr.bf16.gmra.mrb[0].mxu0 %v982
        %v1172 = vpop.f32.mrb[0].mxu0
        %v1173 = vadd.f32 0.0, %v1172
        %v1174 = vpop.f32.mrb[0].mxu0
        %v1175 = vpop.f32.mrb[0].mxu0
        %v1176 = vadd.f32 0.0, %v1175
        %v1177 = vpop.f32.mrb[0].mxu0
        %1178 = vmatprep.mubr.bf16.mxu0 %v1126
        %1179 = vmatmul.mubr.bf16.gmra.mrb[0].mxu0 %v985
        %v1180 = vpop.f32.mrb[0].mxu0
        %v1181 = vadd.f32 0.0, %v1180
        %v1182 = vpop.f32.mrb[0].mxu0
        %v1183 = vpop.f32.mrb[0].mxu0
        %v1184 = vadd.f32 0.0, %v1183
        %v1185 = vpop.f32.mrb[0].mxu0
        %1186 = vmatprep.mubr.bf16.mxu0 %v1128
        %1187 = vmatmul.mubr.bf16.gmra.mrb[0].mxu0 %v988
        %v1188 = vpop.f32.mrb[0].mxu0
        %v1189 = vadd.f32 0.0, %v1188
        %v1190 = vpop.f32.mrb[0].mxu0
        %v1191 = vpop.f32.mrb[0].mxu0
        %v1192 = vadd.f32 0.0, %v1191
        %v1193 = vpop.f32.mrb[0].mxu0
        %1194 = vdwg.mxu0
        %v1195 = vld [vmem:[%s5] sm:$0x1]
        %v1197 = vlaneseq
        %v1198 = vshrl.u32 %v1197, 7
        %v1199 = vsub.s32 0, %v1198
        %v1200 = vrot.slane %v1195, %v1199
        %v1202 = vmul.f32 %v1165, %v1200
        %v1203 = vmul.f32 %v1168, %v1200
        %v1204 = vmul.f32 %v1173, %v1200
        %v1205 = vmul.f32 %v1176, %v1200
        %v1206 = vmul.f32 %v1181, %v1200
        %v1207 = vmul.f32 %v1184, %v1200
        %v1208 = vmul.f32 %v1189, %v1200
        %v1209 = vmul.f32 %v1192, %v1200
        %v1210 = vld [vmem:[%s6] sm:$0x1]
        %v1212 = vlaneseq
        %v1213 = vshrl.u32 %v1212, 7
        %v1214 = vsub.s32 0, %v1213
        %v1215 = vrot.slane %v1210, %v1214
        %v1217 = vadd.f32 %v1202, %v1215
        %v1218 = vadd.f32 %v1203, %v1215
        %v1219 = vadd.f32 %v1204, %v1215
        %v1220 = vadd.f32 %v1205, %v1215
        %v1221 = vadd.f32 %v1206, %v1215
        %v1222 = vadd.f32 %v1207, %v1215
        %v1223 = vadd.f32 %v1208, %v1215
        %v1224 = vadd.f32 %v1209, %v1215
        %v1225 = vadd.f32 %v1217, %v1218
        %v1226 = vadd.f32 %v1225, %v1219
        %v1227 = vadd.f32 %v1226, %v1220
        %v1228 = vadd.f32 %v1227, %v1221
        %v1229 = vadd.f32 %v1228, %v1222
        %v1230 = vadd.f32 %v1229, %v1223
        %v1231 = vadd.f32 %v1230, %v1224
        %v1232 = vrot.slane %v1231, 4
        %v1233 = vadd.f32 %v1231, %v1232
        %v1234 = vrot.slane %v1233, 2
        %v1235 = vadd.f32 %v1233, %v1234
        %v1236 = vrot.slane %v1235, 1
        %v1237 = vadd.f32 %v1235, %v1236
        %v1238 = vrcp.pop 64.0
        %v1239 = vmul.f32 %v1237, %v1238
        %v1240 = vld [vmem:[%s7] sm:$0xff]
        %v1241 = vld [vmem:[%s7 + $0x8] sm:$0xff]
        %v1242 = vld [vmem:[%s7 + $0x10] sm:$0xff]
        %v1243 = vld [vmem:[%s7 + $0x18] sm:$0xff]
        %v1244 = vld [vmem:[%s7 + $0x20] sm:$0xff]
        %v1245 = vld [vmem:[%s7 + $0x28] sm:$0xff]
        %v1246 = vld [vmem:[%s7 + $0x30] sm:$0xff]
        %v1247 = vld [vmem:[%s7 + $0x38] sm:$0xff]
        %v1248 = vld [vmem:[%s7 + $0x40] sm:$0xff]
        %v1249 = vld [vmem:[%s7 + $0x48] sm:$0xff]
        %v1250 = vld [vmem:[%s7 + $0x50] sm:$0xff]
        %v1251 = vld [vmem:[%s7 + $0x58] sm:$0xff]
        %v1252 = vld [vmem:[%s7 + $0x60] sm:$0xff]
        %v1253 = vld [vmem:[%s7 + $0x68] sm:$0xff]
        %v1254 = vld [vmem:[%s7 + $0x70] sm:$0xff]
        %v1255 = vld [vmem:[%s7 + $0x78] sm:$0xff]
        %1256 = vmatprep.subr.mxu0 0.0
        %1257 = vmatpush1.msra.mxu0 %v1240
        %1258 = vmatprep.subr.mxu0 0.0
        %1259 = vmatpush1.msra.mxu0 %v1241
        %1260 = vmatprep.subr.mxu0 0.0
        %1261 = vmatpush1.msra.mxu0 %v1242
        %1262 = vmatprep.subr.mxu0 0.0
        %1263 = vmatpush1.msra.mxu0 %v1243
        %1264 = vmatprep.subr.mxu0 0.0
        %1265 = vmatpush1.msra.mxu0 %v1244
        %1266 = vmatprep.subr.mxu0 0.0
        %1267 = vmatpush1.msra.mxu0 %v1245
        %1268 = vmatprep.subr.mxu0 0.0
        %1269 = vmatpush1.msra.mxu0 %v1246
        %1270 = vmatprep.subr.mxu0 0.0
        %1271 = vmatpush1.msra.mxu0 %v1247
        %1272 = vmatprep.subr.mxu0 0.0
        %1273 = vmatpush1.msra.mxu0 %v1248
        %1274 = vmatprep.subr.mxu0 0.0
        %1275 = vmatpush1.msra.mxu0 %v1249
        %1276 = vmatprep.subr.mxu0 0.0
        %1277 = vmatpush1.msra.mxu0 %v1250
        %1278 = vmatprep.subr.mxu0 0.0
        %1279 = vmatpush1.msra.mxu0 %v1251
        %1280 = vmatprep.subr.mxu0 0.0
        %1281 = vmatpush1.msra.mxu0 %v1252
        %1282 = vmatprep.subr.mxu0 0.0
        %1283 = vmatpush1.msra.mxu0 %v1253
        %1284 = vmatprep.subr.mxu0 0.0
        %1285 = vmatpush1.msra.mxu0 %v1254
        %1286 = vmatprep.subr.mxu0 0.0
        %1287 = vmatpush1.msra.mxu0 %v1255
        %1288 = vmatprep.subr.mxu0 0.0
        %1289 = vmatpush1.msra.mxu0 0.0
        %1290 = vmatprep.subr.mxu0 0.0
        %1291 = vmatpush1.msra.mxu0 0.0
        %1292 = vmatprep.subr.mxu0 0.0
        %1293 = vmatpush1.msra.mxu0 0.0
        %1294 = vmatprep.subr.mxu0 0.0
        %1295 = vmatpush1.msra.mxu0 0.0
        %1296 = vmatprep.subr.mxu0 0.0
        %1297 = vmatpush1.msra.mxu0 0.0
        %1298 = vmatprep.subr.mxu0 0.0
        %1299 = vmatpush1.msra.mxu0 0.0
        %1300 = vmatprep.subr.mxu0 0.0
        %1301 = vmatpush1.msra.mxu0 0.0
        %1302 = vmatprep.subr.mxu0 0.0
        %1303 = vmatpush1.msra.mxu0 0.0
        %1304 = vmatprep.subr.mxu0 0.0
        %1305 = vmatpush1.msra.mxu0 0.0
        %1306 = vmatprep.subr.mxu0 0.0
        %1307 = vmatpush1.msra.mxu0 0.0
        %1308 = vmatprep.subr.mxu0 0.0
        %1309 = vmatpush1.msra.mxu0 0.0
        %1310 = vmatprep.subr.mxu0 0.0
        %1311 = vmatpush1.msra.mxu0 0.0
        %1312 = vmatprep.subr.mxu0 0.0
        %1313 = vmatpush1.msra.mxu0 0.0
        %1314 = vmatprep.subr.mxu0 0.0
        %1315 = vmatpush1.msra.mxu0 0.0
        %1316 = vmatprep.subr.mxu0 0.0
        %1317 = vmatpush1.msra.mxu0 0.0
        %1318 = vmatprep.subr.mxu0 0.0
        %1319 = vmatpush1.msra.mxu0 0.0
        %1320 = vmatprep.mubr.f32.mxu0 0.0
        %1321 = vmatmul.mubr.f32.gmra.mrb[0].mxu0 %v1239
        %v1322 = vpop.f32.mrb[0].mxu0
        %v1323 = vadd.f32 0.0, %v1322
        %v1324 = vpop.f32.mrb[0].mxu0
        %1325 = vdwg.mxu0
        %v1326 = vmax.f32 %v1323, 0.0
        %v1327 = vld [vmem:[%s8] sm:$0xff]
        %vm1328 = vcmask 64512
        %v1330 = vsel %vm1328, %v1326, 0
        %1332 = vmatprep.subr.mxu0 0.0
        %1333 = vmatpush1.msra.mxu0 %v1327
        %1334 = vmatprep.subr.mxu0 0.0
        %1335 = vmatpush1.msra.mxu0 0.0
        %1336 = vmatprep.subr.mxu0 0.0
        %1337 = vmatpush1.msra.mxu0 0.0
        %1338 = vmatprep.subr.mxu0 0.0
        %1339 = vmatpush1.msra.mxu0 0.0
        %1340 = vmatprep.subr.mxu0 0.0
        %1341 = vmatpush1.msra.mxu0 0.0
        %1342 = vmatprep.subr.mxu0 0.0
        %1343 = vmatpush1.msra.mxu0 0.0
        %1344 = vmatprep.subr.mxu0 0.0
        %1345 = vmatpush1.msra.mxu0 0.0
        %1346 = vmatprep.subr.mxu0 0.0
        %1347 = vmatpush1.msra.mxu0 0.0
        %1348 = vmatprep.subr.mxu0 0.0
        %1349 = vmatpush1.msra.mxu0 0.0
        %1350 = vmatprep.subr.mxu0 0.0
        %1351 = vmatpush1.msra.mxu0 0.0
        %1352 = vmatprep.subr.mxu0 0.0
        %1353 = vmatpush1.msra.mxu0 0.0
        %1354 = vmatprep.subr.mxu0 0.0
        %1355 = vmatpush1.msra.mxu0 0.0
        %1356 = vmatprep.subr.mxu0 0.0
        %1357 = vmatpush1.msra.mxu0 0.0
        %1358 = vmatprep.subr.mxu0 0.0
        %1359 = vmatpush1.msra.mxu0 0.0
        %1360 = vmatprep.subr.mxu0 0.0
        %1361 = vmatpush1.msra.mxu0 0.0
        %1362 = vmatprep.subr.mxu0 0.0
        %1363 = vmatpush1.msra.mxu0 0.0
        %1364 = vmatprep.subr.mxu0 0.0
        %1365 = vmatpush1.msra.mxu0 0.0
        %1366 = vmatprep.subr.mxu0 0.0
        %1367 = vmatpush1.msra.mxu0 0.0
        %1368 = vmatprep.subr.mxu0 0.0
        %1369 = vmatpush1.msra.mxu0 0.0
        %1370 = vmatprep.subr.mxu0 0.0
        %1371 = vmatpush1.msra.mxu0 0.0
        %1372 = vmatprep.subr.mxu0 0.0
        %1373 = vmatpush1.msra.mxu0 0.0
        %1374 = vmatprep.subr.mxu0 0.0
        %1375 = vmatpush1.msra.mxu0 0.0
        %1376 = vmatprep.subr.mxu0 0.0
        %1377 = vmatpush1.msra.mxu0 0.0
        %1378 = vmatprep.subr.mxu0 0.0
        %1379 = vmatpush1.msra.mxu0 0.0
        %1380 = vmatprep.subr.mxu0 0.0
        %1381 = vmatpush1.msra.mxu0 0.0
        %1382 = vmatprep.subr.mxu0 0.0
        %1383 = vmatpush1.msra.mxu0 0.0
        %1384 = vmatprep.subr.mxu0 0.0
        %1385 = vmatpush1.msra.mxu0 0.0
        %1386 = vmatprep.subr.mxu0 0.0
        %1387 = vmatpush1.msra.mxu0 0.0
        %1388 = vmatprep.subr.mxu0 0.0
        %1389 = vmatpush1.msra.mxu0 0.0
        %1390 = vmatprep.subr.mxu0 0.0
        %1391 = vmatpush1.msra.mxu0 0.0
        %1392 = vmatprep.subr.mxu0 0.0
        %1393 = vmatpush1.msra.mxu0 0.0
        %1394 = vmatprep.subr.mxu0 0.0
        %1395 = vmatpush1.msra.mxu0 0.0
        %1396 = vmatprep.mubr.f32.mxu0 0.0
        %1397 = vmatmul.mubr.f32.gmra.mrb[0].mxu0 %v1330
        %v1398 = vpop.f32.mrb[0].mxu0
        %v1399 = vadd.f32 0.0, %v1398
        %v1400 = vpop.f32.mrb[0].mxu0
        %1401 = vdwg.mxu0
        %v1402 = vsub.f32 0.0, %v1399
        %v1403 = vmul.f32 %v1402, 1.442695
        %v1404 = vpow.pop %v1403
        %v1405 = vadd.f32 %v1404, 1.0
        %v1406 = vrcp.pop %v1405
        %v1407 = vlaneseq
        %v1408 = vshrl.u32 %v1407, 7
        %v1409 = vsub.s32 0, %v1408
        %v1410 = vrot.slane %v1406, %v1409
        %v1411 = vmul.f32 %v1217, %v1410
        %v1412 = vmul.f32 %v1218, %v1410
        %v1413 = vmul.f32 %v1219, %v1410
        %v1414 = vmul.f32 %v1220, %v1410
        %v1415 = vmul.f32 %v1221, %v1410
        %v1416 = vmul.f32 %v1222, %v1410
        %v1417 = vmul.f32 %v1223, %v1410
        %v1418 = vmul.f32 %v1224, %v1410
        %v1419 = vsel %vm500, %v332, 0.0
        %v1420 = vsel %vm500, %v333, 0.0
        %v1421 = vsel %vm500, %v334, 0.0
        %v1422 = vsel %vm500, %v335, 0.0
        %v1423 = vsel %vm500, %v336, 0.0
        %v1424 = vsel %vm500, %v337, 0.0
        %v1425 = vsel %vm500, %v338, 0.0
        %v1426 = vsel %vm500, %v339, 0.0
        %v1427 = vsel %vm500, %v340, 0.0
        %vm1437 = vcmask 1044480
        %v1438 = vrot.slane %v1419, 3
        %v1439 = vrot.slane %v1420, 3
        %v1440 = vsel %vm1437, %v1438, %v1439
        %v1441 = vrot.slane %v1421, 3
        %v1442 = vsel %vm1437, %v1439, %v1441
        %v1443 = vrot.slane %v1422, 3
        %v1444 = vsel %vm1437, %v1441, %v1443
        %v1445 = vrot.slane %v1423, 3
        %v1446 = vsel %vm1437, %v1443, %v1445
        %v1447 = vrot.slane %v1424, 3
        %v1448 = vsel %vm1437, %v1445, %v1447
        %v1449 = vrot.slane %v1425, 3
        %v1450 = vsel %vm1437, %v1447, %v1449
        %v1451 = vrot.slane %v1426, 3
        %v1452 = vsel %vm1437, %v1449, %v1451
        %v1453 = vrot.slane %v1427, 3
        %v1454 = vsel %vm1437, %v1451, %v1453
        %v1463 = vadd.f32 %v1411, %v1440
        %v1464 = vadd.f32 %v1412, %v1442
        %v1465 = vadd.f32 %v1413, %v1444
        %v1466 = vadd.f32 %v1414, %v1446
        %v1467 = vadd.f32 %v1415, %v1448
        %v1468 = vadd.f32 %v1416, %v1450
        %v1469 = vadd.f32 %v1417, %v1452
        %v1470 = vadd.f32 %v1418, %v1454
        %v1471 = vmax.f32 %v1463, 0.0
        %v1472 = vmax.f32 %v1464, 0.0
        %v1473 = vmax.f32 %v1465, 0.0
        %v1474 = vmax.f32 %v1466, 0.0
        %v1475 = vmax.f32 %v1467, 0.0
        %v1476 = vmax.f32 %v1468, 0.0
        %v1477 = vmax.f32 %v1469, 0.0
        %v1478 = vmax.f32 %v1470, 0.0
        %1479 = vst [vmem:[%s325] sm:$0xff] %v1471
        %1480 = vst [vmem:[%s325 + $0x8] sm:$0xff] %v1472
        %1481 = vst [vmem:[%s325 + $0x10] sm:$0xff] %v1473
        %1482 = vst [vmem:[%s325 + $0x18] sm:$0xff] %v1474
        %1483 = vst [vmem:[%s325 + $0x20] sm:$0xff] %v1475
        %1484 = vst [vmem:[%s325 + $0x28] sm:$0xff] %v1476
        %1485 = vst [vmem:[%s325 + $0x30] sm:$0xff] %v1477
        %1486 = vst [vmem:[%s325 + $0x38] sm:$0xff] %v1478
        %s1487 = sand.u32 %s225, 1
        %s1488 = scalar_lea.sflag [#allocation3], %s1487
        %s1489 = sand.u32 %s225, 1
        %s1490 = smul.addr %s1489, 64
        %s1491 = scalar_lea.vmem [#allocation2], %s1490
        // Predicated region
        $region57: #{tpu_custom_call.1} parent=55 // pred_check
          %p1492 = pneg %p235
        $region58: #{tpu_custom_call.1} parent=55 // pred_check_branch
          %1494 = sbr.rel (%p1492) target = $region60
        $region59: #{tpu_custom_call.1} parent=55 // pred_region
          %s1496 = ssub.s32 1024, 1024
          %1497 = vsyncadd %s1488, %s1496
          %s1498 = smul.addr %s23, 8
          %s1499 = smul.addr %s1498, 128
          %s1500 = scalar_lea.hbm %s9, %s1499
          %s1501 = sshll.u32 %s1491, 4
          %s1502 = int_to_ptr.vmem [resolvable:$true] %s1501
          %1507 = dma.vmem_to_hbm [thread:$0]  %s1502, 1024, %s1500, %s1488, 128, 128, 8
        $region60: #{tpu_custom_call.1} parent=55 // pred_fallthru
          _
      $region56: #{tpu_custom_call.1} parent=5 // pred_fallthru
        _
      %p1508 = scmp.le.s32.totalorder 2, %s18
      // Predicated region
      $region61: #{tpu_custom_call.1} parent=5 // pred_check
        %p1509 = pneg %p1508
      $region62: #{tpu_custom_call.1} parent=5 // pred_check_branch
        %1511 = sbr.rel (%p1509) target = $region64
      $region63: #{tpu_custom_call.1} parent=5 // pred_region
        %s1512 = ssub.s32 %s18, 2
        // Predicated region
        $region65: #{tpu_custom_call.1} parent=63 // pred_check
          %p1513 = pneg %p241
        $region66: #{tpu_custom_call.1} parent=63 // pred_check_branch
          %1515 = sbr.rel (%p1513) target = $region68
        $region67: #{tpu_custom_call.1} parent=63 // pred_region
          %s1516 = sand.u32 %s226, 1
          %s1517 = scalar_lea.sflag [#allocation3], %s1516
          %s1518 = sand.u32 %s226, 1
          %s1519 = smul.addr %s1518, 64
          %s1520 = scalar_lea.vmem [#allocation2], %s1519
          %1521 = dma.done %s1517, 1024
        $region68: #{tpu_custom_call.1} parent=63 // pred_fallthru
          _
      $region64: #{tpu_custom_call.1} parent=5 // pred_fallthru
        _
    $region6: #{tpu_custom_call.1} parent=1 // loop_footer
      %s22 = sadd.s32 1, %s18
    $region7: #{tpu_custom_call.1} parent=1 // loop_footer_branch
      %17 = sbr.rel target = $region3
    $region8: #{tpu_custom_call.1} parent=1 // loop_exit
      _
    %1522 = vsyncpa [#allocation3], 1
    %s1523 = scalar_lea.sflag [#allocation3], 1
    %1524 = vsyncpa %s1523, 1

</llo_original>
